<compile_context>
chip_gen: v7x
topology: tpu7x:2x2x1
jax: 0.10.0
libtpu: 0.0.40
codegen_flags: <defaults>
</compile_context>

<pallas_src>
import functools

import jax
import jax.numpy as jnp
from jax.experimental import pallas as pl
from jax.experimental.pallas import tpu as pltpu


# ---------------------------------------------------------------------------
# Fused forward kernel (built per num_layers; the Python loop unrolls at trace
# time, each layer reads its own weight refs).
# ---------------------------------------------------------------------------
def _make_fused_kernel(num_layers):
    def kernel(*refs):
        adj_ref, x_ref, sel_ref, cidn_t_ref, cid_ref = refs[:5]
        conv_refs = refs[5:5 + 3 * num_layers]
        wa_ref, wb_ref, bfc_ref, out_ref = refs[5 + 3 * num_layers:]

        adj = adj_ref[...]                                   # [N, N]
        x = x_ref[...]                                       # [N, F]

        # ---- SAGEConv stack: x = relu(agg @ W_l + x @ W_r + b) -------------
        for l in range(num_layers):
            w_l = conv_refs[3 * l][...]
            w_r = conv_refs[3 * l + 1][...]
            b_l = conv_refs[3 * l + 2][...]                  # [1, H]
            agg = jnp.dot(adj, x, preferred_element_type=jnp.float32)
            h = (jnp.dot(agg, w_l, preferred_element_type=jnp.float32)
                 + jnp.dot(x, w_r, preferred_element_type=jnp.float32)
                 + b_l)
            x = jnp.maximum(h, 0.0)
            # dropout(training=False) -> identity

        # ---- cluster features (all one-hot matmuls, MXU-resident) ----------
        # x_sel = x[cluster_index]              (row gather as one-hot matmul)
        x_sel = jnp.dot(sel_ref[...], x, preferred_element_type=jnp.float32)  # [M, H]
        # cf = (cluster_id.T @ x_sel) / counts  (normalization folded in wrapper)
        cf = jnp.dot(cidn_t_ref[...], x_sel,
                     preferred_element_type=jnp.float32)                      # [C, H]
        # x1 = cf[cluster_id.argmax(1)] == cluster_id @ cf  (cluster_id one-hot)
        x1 = jnp.dot(cid_ref[...], cf, preferred_element_type=jnp.float32)    # [M, H]

        # ---- fc1 on split weights (no [2M, 2H] concat materialized) --------
        wa = wa_ref[...]                                      # [H, O2]
        wb = wb_ref[...]                                      # [H, O2]
        bfc = bfc_ref[...]                                    # [1, O2]
        top = (jnp.dot(x_sel, wa, preferred_element_type=jnp.float32)
               + jnp.dot(x1, wb, preferred_element_type=jnp.float32) + bfc)
        bot = (jnp.dot(x1, wa, preferred_element_type=jnp.float32)
               + jnp.dot(x_sel, wb, preferred_element_type=jnp.float32) + bfc)

        m = top.shape[0]
        out_ref[pl.ds(0, m), :] = top
        out_ref[pl.ds(m, m), :] = bot

    return kernel


def _full_spec(shape):
    n = len(shape)
    return pl.BlockSpec(shape, lambda i, _n=n: (0,) * _n)


# ---------------------------------------------------------------------------
# SAGE forward (inference: dropout is identity).  One pallas_call total.
# ---------------------------------------------------------------------------
def sage_forward(params, x, adj, cluster_id, cluster_index, is_val=False):
    if is_val:
        # TODO(synk): the reference is_val=True branch is shape-inconsistent
        # unless M == N (cat([x:[N,H], x1:[M,H]], dim=1)); not implemented.
        raise NotImplementedError("is_val=True branch not supported")

    N = x.shape[0]
    M, C = cluster_id.shape
    o2 = params["fc1_wa"].shape[1]

    # Tiny glue on [M,*] tensors so the kernel is pure matmuls:
    #  - sel: one-hot row selector so x[cluster_index] == sel @ x
    #  - cid_norm_t: column-normalized cluster_id.T so cf is a single matmul
    #    (max(count,1) guards empty clusters against 0/0 -> NaN)
    sel = jax.nn.one_hot(cluster_index, N, dtype=jnp.float32)          # [M, N]
    counts = jnp.maximum(jnp.sum(cluster_id, axis=0, keepdims=True), 1.0)
    cid_norm_t = (cluster_id / counts).T                               # [C, M]

    args = [adj, x, sel, cid_norm_t, cluster_id]
    for (w_l, w_r, b_l) in params["convs"]:
        args += [w_l, w_r, b_l.reshape(1, -1)]
    args += [params["fc1_wa"], params["fc1_wb"], params["fc1_b"].reshape(1, o2)]

    kernel = _make_fused_kernel(len(params["convs"]))
    return pl.pallas_call(
        kernel,
        out_shape=jax.ShapeDtypeStruct((2 * M, o2), jnp.float32),
        grid=(1,),
        in_specs=[_full_spec(a.shape) for a in args],
        out_specs=_full_spec((2 * M, o2)),
        compiler_params=pltpu.CompilerParams(
            dimension_semantics=("arbitrary",)),
    )(*args)


# ---------------------------------------------------------------------------
# Deterministic parameter init (shapes from the module's __init__).
# fc1 weight is split once here into its [H, O2] halves.
# ---------------------------------------------------------------------------
def init_params(key, in_channels, hidden_channels, out_channels, num_layers):
    params = {"convs": []}
    dims = [(in_channels, hidden_channels)] + \
           [(hidden_channels, hidden_channels)] * (num_layers - 1)
    for (cin, cout) in dims:
        key, k1, k2, k3 = jax.random.split(key, 4)
        w_l = jax.random.normal(k1, (cin, cout), jnp.float32) * 0.1  # lin_l (agg)
        w_r = jax.random.normal(k2, (cin, cout), jnp.float32) * 0.1  # lin_r (root)
        b_l = jax.random.normal(k3, (cout,), jnp.float32) * 0.01
        params["convs"].append((w_l, w_r, b_l))
    key, k1, k2 = jax.random.split(key, 3)
    o2 = out_channels * out_channels
    fc1_w = jax.random.normal(k1, (hidden_channels * 2, o2), jnp.float32) * 0.1
    params["fc1_wa"] = fc1_w[:hidden_channels]    # acts on the first H columns
    params["fc1_wb"] = fc1_w[hidden_channels:]    # acts on the second H columns
    params["fc1_b"] = jax.random.normal(k2, (o2,), jnp.float32) * 0.01
    return params


if __name__ == "__main__":
    # Small, module-consistent shapes.
    N = 64          # number of graph nodes
    IN = 16         # in_channels
    HID = 32        # hidden_channels
    OUT = 4         # out_channels  -> fc1 output = OUT*OUT = 16
    LAYERS = 2      # num_layers
    M = 32          # len(cluster_index)
    C = 8           # number of clusters

    key = jax.random.PRNGKey(0)
    key, kx, ka, kp, kperm = jax.random.split(key, 5)

    # node features
    x = jax.random.normal(kx, (N, IN), jnp.float32)

    # dense row-normalized adjacency (mean aggregation operator)
    raw = (jax.random.uniform(ka, (N, N)) < 0.1).astype(jnp.float32)
    raw = raw + jnp.eye(N, dtype=jnp.float32)        # guarantee nonzero rows
    adj = raw / jnp.sum(raw, axis=1, keepdims=True)

    # cluster assignment: one-hot [M, C], every cluster nonempty
    cluster_index = jax.random.permutation(kperm, N)[:M].astype(jnp.int32)
    assignment = jnp.arange(M, dtype=jnp.int32) % C
    cluster_id = jax.nn.one_hot(assignment, C, dtype=jnp.float32)

    params = init_params(kp, IN, HID, OUT, LAYERS)

    fwd = jax.jit(functools.partial(sage_forward, is_val=False))
    out = fwd(params, x, adj, cluster_id, cluster_index)
    jax.block_until_ready(out)

    assert out.shape == (2 * M, OUT * OUT), out.shape
    assert jnp.all(jnp.isfinite(out))
    print("KERNEL_OK")
</pallas_src>

<mosaic_0001>
module attributes {stable_mosaic.version = 11 : i64} {
  func.func @kernel(%arg0: i32, %arg1: memref<64x64xf32, #tpu.memory_space<vmem>>, %arg2: memref<64x16xf32, #tpu.memory_space<vmem>>, %arg3: memref<32x64xf32, #tpu.memory_space<vmem>>, %arg4: memref<8x32xf32, #tpu.memory_space<vmem>>, %arg5: memref<32x8xf32, #tpu.memory_space<vmem>>, %arg6: memref<16x32xf32, #tpu.memory_space<vmem>>, %arg7: memref<16x32xf32, #tpu.memory_space<vmem>>, %arg8: memref<1x32xf32, #tpu.memory_space<vmem>>, %arg9: memref<32x32xf32, #tpu.memory_space<vmem>>, %arg10: memref<32x32xf32, #tpu.memory_space<vmem>>, %arg11: memref<1x32xf32, #tpu.memory_space<vmem>>, %arg12: memref<32x16xf32, #tpu.memory_space<vmem>>, %arg13: memref<32x16xf32, #tpu.memory_space<vmem>>, %arg14: memref<1x16xf32, #tpu.memory_space<vmem>>, %arg15: memref<64x16xf32, #tpu.memory_space<vmem>>) attributes {dimension_semantics = [#tpu.dimension_semantics<arbitrary>], iteration_bounds = array<i64: 1>, scalar_prefetch = 0 : i64, scratch_operands = 0 : i64, tpu.core_type = #tpu.core_type<tc>, window_params = [{pipeline_mode = #tpu.pipeline_mode<synchronous>, transform_indices = @transform_0, window_bounds = array<i64: 64, 64>}, {pipeline_mode = #tpu.pipeline_mode<synchronous>, transform_indices = @transform_1, window_bounds = array<i64: 64, 16>}, {pipeline_mode = #tpu.pipeline_mode<synchronous>, transform_indices = @transform_2, window_bounds = array<i64: 32, 64>}, {pipeline_mode = #tpu.pipeline_mode<synchronous>, transform_indices = @transform_3, window_bounds = array<i64: 8, 32>}, {pipeline_mode = #tpu.pipeline_mode<synchronous>, transform_indices = @transform_4, window_bounds = array<i64: 32, 8>}, {pipeline_mode = #tpu.pipeline_mode<synchronous>, transform_indices = @transform_5, window_bounds = array<i64: 16, 32>}, {pipeline_mode = #tpu.pipeline_mode<synchronous>, transform_indices = @transform_6, window_bounds = array<i64: 16, 32>}, {pipeline_mode = #tpu.pipeline_mode<synchronous>, transform_indices = @transform_7, window_bounds = array<i64: 1, 32>}, {pipeline_mode = #tpu.pipeline_mode<synchronous>, transform_indices = @transform_8, window_bounds = array<i64: 32, 32>}, {pipeline_mode = #tpu.pipeline_mode<synchronous>, transform_indices = @transform_9, window_bounds = array<i64: 32, 32>}, {pipeline_mode = #tpu.pipeline_mode<synchronous>, transform_indices = @transform_10, window_bounds = array<i64: 1, 32>}, {pipeline_mode = #tpu.pipeline_mode<synchronous>, transform_indices = @transform_11, window_bounds = array<i64: 32, 16>}, {pipeline_mode = #tpu.pipeline_mode<synchronous>, transform_indices = @transform_12, window_bounds = array<i64: 32, 16>}, {pipeline_mode = #tpu.pipeline_mode<synchronous>, transform_indices = @transform_13, window_bounds = array<i64: 1, 16>}, {pipeline_mode = #tpu.pipeline_mode<synchronous>, transform_indices = @transform_14, window_bounds = array<i64: 64, 16>}]} {
    %c0 = arith.constant 0 : index
    %c0_0 = arith.constant 0 : index
    %0 = vector.load %arg1[%c0, %c0_0] : memref<64x64xf32, #tpu.memory_space<vmem>>, vector<64x64xf32>
    %c0_1 = arith.constant 0 : index
    %c0_2 = arith.constant 0 : index
    %1 = vector.load %arg2[%c0_1, %c0_2] : memref<64x16xf32, #tpu.memory_space<vmem>>, vector<64x16xf32>
    %c0_3 = arith.constant 0 : index
    %c0_4 = arith.constant 0 : index
    %2 = vector.load %arg6[%c0_3, %c0_4] : memref<16x32xf32, #tpu.memory_space<vmem>>, vector<16x32xf32>
    %c0_5 = arith.constant 0 : index
    %c0_6 = arith.constant 0 : index
    %3 = vector.load %arg7[%c0_5, %c0_6] : memref<16x32xf32, #tpu.memory_space<vmem>>, vector<16x32xf32>
    %c0_7 = arith.constant 0 : index
    %c0_8 = arith.constant 0 : index
    %4 = vector.load %arg8[%c0_7, %c0_8] : memref<1x32xf32, #tpu.memory_space<vmem>>, vector<1x32xf32>
    %cst = arith.constant dense<0.000000e+00> : vector<64x16xf32>
    %5 = tpu.matmul %0, %1, %cst {dimension_numbers = #tpu.dot_dimension_numbers<[1], [0], [0], [1], [0, 0, 1, 1], [], []>} : vector<64x64xf32>, vector<64x16xf32>, vector<64x16xf32> -> vector<64x16xf32>
    %cst_9 = arith.constant dense<0.000000e+00> : vector<64x32xf32>
    %6 = tpu.matmul %5, %2, %cst_9 {dimension_numbers = #tpu.dot_dimension_numbers<[1], [0], [0], [1], [0, 0, 1, 1], [], []>} : vector<64x16xf32>, vector<16x32xf32>, vector<64x32xf32> -> vector<64x32xf32>
    %cst_10 = arith.constant dense<0.000000e+00> : vector<64x32xf32>
    %7 = tpu.matmul %1, %3, %cst_10 {dimension_numbers = #tpu.dot_dimension_numbers<[1], [0], [0], [1], [0, 0, 1, 1], [], []>} : vector<64x16xf32>, vector<16x32xf32>, vector<64x32xf32> -> vector<64x32xf32>
    %8 = arith.addf %6, %7 : vector<64x32xf32>
    %9 = vector.broadcast %4 : vector<1x32xf32> to vector<64x32xf32>
    %10 = arith.addf %8, %9 : vector<64x32xf32>
    %cst_11 = arith.constant 0.000000e+00 : f32
    %11 = vector.broadcast %cst_11 : f32 to vector<64x32xf32>
    %12 = arith.maximumf %10, %11 : vector<64x32xf32>
    %c0_12 = arith.constant 0 : index
    %c0_13 = arith.constant 0 : index
    %13 = vector.load %arg9[%c0_12, %c0_13] : memref<32x32xf32, #tpu.memory_space<vmem>>, vector<32x32xf32>
    %c0_14 = arith.constant 0 : index
    %c0_15 = arith.constant 0 : index
    %14 = vector.load %arg10[%c0_14, %c0_15] : memref<32x32xf32, #tpu.memory_space<vmem>>, vector<32x32xf32>
    %c0_16 = arith.constant 0 : index
    %c0_17 = arith.constant 0 : index
    %15 = vector.load %arg11[%c0_16, %c0_17] : memref<1x32xf32, #tpu.memory_space<vmem>>, vector<1x32xf32>
    %cst_18 = arith.constant dense<0.000000e+00> : vector<64x32xf32>
    %16 = tpu.matmul %0, %12, %cst_18 {dimension_numbers = #tpu.dot_dimension_numbers<[1], [0], [0], [1], [0, 0, 1, 1], [], []>} : vector<64x64xf32>, vector<64x32xf32>, vector<64x32xf32> -> vector<64x32xf32>
    %cst_19 = arith.constant dense<0.000000e+00> : vector<64x32xf32>
    %17 = tpu.matmul %16, %13, %cst_19 {dimension_numbers = #tpu.dot_dimension_numbers<[1], [0], [0], [1], [0, 0, 1, 1], [], []>} : vector<64x32xf32>, vector<32x32xf32>, vector<64x32xf32> -> vector<64x32xf32>
    %cst_20 = arith.constant dense<0.000000e+00> : vector<64x32xf32>
    %18 = tpu.matmul %12, %14, %cst_20 {dimension_numbers = #tpu.dot_dimension_numbers<[1], [0], [0], [1], [0, 0, 1, 1], [], []>} : vector<64x32xf32>, vector<32x32xf32>, vector<64x32xf32> -> vector<64x32xf32>
    %19 = arith.addf %17, %18 : vector<64x32xf32>
    %20 = vector.broadcast %15 : vector<1x32xf32> to vector<64x32xf32>
    %21 = arith.addf %19, %20 : vector<64x32xf32>
    %cst_21 = arith.constant 0.000000e+00 : f32
    %22 = vector.broadcast %cst_21 : f32 to vector<64x32xf32>
    %23 = arith.maximumf %21, %22 : vector<64x32xf32>
    %c0_22 = arith.constant 0 : index
    %c0_23 = arith.constant 0 : index
    %24 = vector.load %arg3[%c0_22, %c0_23] : memref<32x64xf32, #tpu.memory_space<vmem>>, vector<32x64xf32>
    %cst_24 = arith.constant dense<0.000000e+00> : vector<32x32xf32>
    %25 = tpu.matmul %24, %23, %cst_24 {dimension_numbers = #tpu.dot_dimension_numbers<[1], [0], [0], [1], [0, 0, 1, 1], [], []>} : vector<32x64xf32>, vector<64x32xf32>, vector<32x32xf32> -> vector<32x32xf32>
    %c0_25 = arith.constant 0 : index
    %c0_26 = arith.constant 0 : index
    %26 = vector.load %arg4[%c0_25, %c0_26] : memref<8x32xf32, #tpu.memory_space<vmem>>, vector<8x32xf32>
    %cst_27 = arith.constant dense<0.000000e+00> : vector<8x32xf32>
    %27 = tpu.matmul %26, %25, %cst_27 {dimension_numbers = #tpu.dot_dimension_numbers<[1], [0], [0], [1], [0, 0, 1, 1], [], []>} : vector<8x32xf32>, vector<32x32xf32>, vector<8x32xf32> -> vector<8x32xf32>
    %c0_28 = arith.constant 0 : index
    %c0_29 = arith.constant 0 : index
    %28 = vector.load %arg5[%c0_28, %c0_29] : memref<32x8xf32, #tpu.memory_space<vmem>>, vector<32x8xf32>
    %cst_30 = arith.constant dense<0.000000e+00> : vector<32x32xf32>
    %29 = tpu.matmul %28, %27, %cst_30 {dimension_numbers = #tpu.dot_dimension_numbers<[1], [0], [0], [1], [0, 0, 1, 1], [], []>} : vector<32x8xf32>, vector<8x32xf32>, vector<32x32xf32> -> vector<32x32xf32>
    %c0_31 = arith.constant 0 : index
    %c0_32 = arith.constant 0 : index
    %30 = vector.load %arg12[%c0_31, %c0_32] : memref<32x16xf32, #tpu.memory_space<vmem>>, vector<32x16xf32>
    %c0_33 = arith.constant 0 : index
    %c0_34 = arith.constant 0 : index
    %31 = vector.load %arg13[%c0_33, %c0_34] : memref<32x16xf32, #tpu.memory_space<vmem>>, vector<32x16xf32>
    %c0_35 = arith.constant 0 : index
    %c0_36 = arith.constant 0 : index
    %32 = vector.load %arg14[%c0_35, %c0_36] : memref<1x16xf32, #tpu.memory_space<vmem>>, vector<1x16xf32>
    %cst_37 = arith.constant dense<0.000000e+00> : vector<32x16xf32>
    %33 = tpu.matmul %25, %30, %cst_37 {dimension_numbers = #tpu.dot_dimension_numbers<[1], [0], [0], [1], [0, 0, 1, 1], [], []>} : vector<32x32xf32>, vector<32x16xf32>, vector<32x16xf32> -> vector<32x16xf32>
    %cst_38 = arith.constant dense<0.000000e+00> : vector<32x16xf32>
    %34 = tpu.matmul %29, %31, %cst_38 {dimension_numbers = #tpu.dot_dimension_numbers<[1], [0], [0], [1], [0, 0, 1, 1], [], []>} : vector<32x32xf32>, vector<32x16xf32>, vector<32x16xf32> -> vector<32x16xf32>
    %35 = arith.addf %33, %34 : vector<32x16xf32>
    %36 = vector.broadcast %32 : vector<1x16xf32> to vector<32x16xf32>
    %37 = arith.addf %35, %36 : vector<32x16xf32>
    %cst_39 = arith.constant dense<0.000000e+00> : vector<32x16xf32>
    %38 = tpu.matmul %29, %30, %cst_39 {dimension_numbers = #tpu.dot_dimension_numbers<[1], [0], [0], [1], [0, 0, 1, 1], [], []>} : vector<32x32xf32>, vector<32x16xf32>, vector<32x16xf32> -> vector<32x16xf32>
    %cst_40 = arith.constant dense<0.000000e+00> : vector<32x16xf32>
    %39 = tpu.matmul %25, %31, %cst_40 {dimension_numbers = #tpu.dot_dimension_numbers<[1], [0], [0], [1], [0, 0, 1, 1], [], []>} : vector<32x32xf32>, vector<32x16xf32>, vector<32x16xf32> -> vector<32x16xf32>
    %40 = arith.addf %38, %39 : vector<32x16xf32>
    %41 = vector.broadcast %32 : vector<1x16xf32> to vector<32x16xf32>
    %42 = arith.addf %40, %41 : vector<32x16xf32>
    %c0_41 = arith.constant 0 : index
    %c0_42 = arith.constant 0 : index
    %43 = vector.load %arg15[%c0_41, %c0_42] : memref<64x16xf32, #tpu.memory_space<vmem>>, vector<32x16xf32>
    tpu.vector_store %arg15[%c0_41, %c0_42], %37 {strides = array<i32>} : memref<64x16xf32, #tpu.memory_space<vmem>>, vector<32x16xf32>,
    %c32 = arith.constant 32 : index
    %c0_43 = arith.constant 0 : index
    %44 = vector.load %arg15[%c32, %c0_43] : memref<64x16xf32, #tpu.memory_space<vmem>>, vector<32x16xf32>
    tpu.vector_store %arg15[%c32, %c0_43], %42 {strides = array<i32>} : memref<64x16xf32, #tpu.memory_space<vmem>>, vector<32x16xf32>,
    return
  }
  func.func @transform_0(%arg0: i32) -> (i32, i32) {
    %c0_i32 = arith.constant 0 : i32
    %c0_i32_0 = arith.constant 0 : i32
    %c0_i32_1 = arith.constant 0 : i32
    return %c0_i32, %c0_i32_0 : i32, i32
  }
  func.func @transform_1(%arg0: i32) -> (i32, i32) {
    %c0_i32 = arith.constant 0 : i32
    %c0_i32_0 = arith.constant 0 : i32
    %c0_i32_1 = arith.constant 0 : i32
    return %c0_i32, %c0_i32_0 : i32, i32
  }
  func.func @transform_2(%arg0: i32) -> (i32, i32) {
    %c0_i32 = arith.constant 0 : i32
    %c0_i32_0 = arith.constant 0 : i32
    %c0_i32_1 = arith.constant 0 : i32
    return %c0_i32, %c0_i32_0 : i32, i32
  }
  func.func @transform_3(%arg0: i32) -> (i32, i32) {
    %c0_i32 = arith.constant 0 : i32
    %c0_i32_0 = arith.constant 0 : i32
    %c0_i32_1 = arith.constant 0 : i32
    return %c0_i32, %c0_i32_0 : i32, i32
  }
  func.func @transform_4(%arg0: i32) -> (i32, i32) {
    %c0_i32 = arith.constant 0 : i32
    %c0_i32_0 = arith.constant 0 : i32
    %c0_i32_1 = arith.constant 0 : i32
    return %c0_i32, %c0_i32_0 : i32, i32
  }
  func.func @transform_5(%arg0: i32) -> (i32, i32) {
    %c0_i32 = arith.constant 0 : i32
    %c0_i32_0 = arith.constant 0 : i32
    %c0_i32_1 = arith.constant 0 : i32
    return %c0_i32, %c0_i32_0 : i32, i32
  }
  func.func @transform_6(%arg0: i32) -> (i32, i32) {
    %c0_i32 = arith.constant 0 : i32
    %c0_i32_0 = arith.constant 0 : i32
    %c0_i32_1 = arith.constant 0 : i32
    return %c0_i32, %c0_i32_0 : i32, i32
  }
  func.func @transform_7(%arg0: i32) -> (i32, i32) {
    %c0_i32 = arith.constant 0 : i32
    %c0_i32_0 = arith.constant 0 : i32
    %c0_i32_1 = arith.constant 0 : i32
    return %c0_i32, %c0_i32_0 : i32, i32
  }
  func.func @transform_8(%arg0: i32) -> (i32, i32) {
    %c0_i32 = arith.constant 0 : i32
    %c0_i32_0 = arith.constant 0 : i32
    %c0_i32_1 = arith.constant 0 : i32
    return %c0_i32, %c0_i32_0 : i32, i32
  }
  func.func @transform_9(%arg0: i32) -> (i32, i32) {
    %c0_i32 = arith.constant 0 : i32
    %c0_i32_0 = arith.constant 0 : i32
    %c0_i32_1 = arith.constant 0 : i32
    return %c0_i32, %c0_i32_0 : i32, i32
  }
  func.func @transform_10(%arg0: i32) -> (i32, i32) {
    %c0_i32 = arith.constant 0 : i32
    %c0_i32_0 = arith.constant 0 : i32
    %c0_i32_1 = arith.constant 0 : i32
    return %c0_i32, %c0_i32_0 : i32, i32
  }
  func.func @transform_11(%arg0: i32) -> (i32, i32) {
    %c0_i32 = arith.constant 0 : i32
    %c0_i32_0 = arith.constant 0 : i32
    %c0_i32_1 = arith.constant 0 : i32
    return %c0_i32, %c0_i32_0 : i32, i32
  }
  func.func @transform_12(%arg0: i32) -> (i32, i32) {
    %c0_i32 = arith.constant 0 : i32
    %c0_i32_0 = arith.constant 0 : i32
    %c0_i32_1 = arith.constant 0 : i32
    return %c0_i32, %c0_i32_0 : i32, i32
  }
  func.func @transform_13(%arg0: i32) -> (i32, i32) {
    %c0_i32 = arith.constant 0 : i32
    %c0_i32_0 = arith.constant 0 : i32
    %c0_i32_1 = arith.constant 0 : i32
    return %c0_i32, %c0_i32_0 : i32, i32
  }
  func.func @transform_14(%arg0: i32) -> (i32, i32) {
    %c0_i32 = arith.constant 0 : i32
    %c0_i32_0 = arith.constant 0 : i32
    %c0_i32_1 = arith.constant 0 : i32
    return %c0_i32, %c0_i32_0 : i32, i32
  }
}

</mosaic_0001>

<llo_original>
// kernel: sage_forward.1
$region0: #{sage_forward.1}
  #allocation0 [shape = 'u32[]', space=smem, size = 0x4, offset = 0x4, fixed_abs, tag = 'smem constant byte address 0x4 - core index']
  #allocation1 [shape = 'u32[144,128]{1,0:T(1,128)}', space=vmem, size = 0x12000, scoped, tag = 'internal scratch']
  %s0 = inlined_call_operand.vmem [shape: f32[64,64], index: 0, kind: input, shape index: {}]
  %s1 = inlined_call_operand.vmem [shape: f32[64,16], index: 1, kind: input, shape index: {}]
  %s2 = inlined_call_operand.vmem [shape: f32[32,64], index: 2, kind: input, shape index: {}]
  %s3 = inlined_call_operand.vmem [shape: f32[8,32], index: 3, kind: input, shape index: {}]
  %s4 = inlined_call_operand.vmem [shape: f32[32,8], index: 4, kind: input, shape index: {}]
  %s5 = inlined_call_operand.vmem [shape: f32[16,32], index: 5, kind: input, shape index: {}]
  %s6 = inlined_call_operand.vmem [shape: f32[16,32], index: 6, kind: input, shape index: {}]
  %s7 = inlined_call_operand.vmem [shape: f32[1,32], index: 7, kind: input, shape index: {}]
  %s8 = inlined_call_operand.vmem [shape: f32[32,32], index: 8, kind: input, shape index: {}]
  %s9 = inlined_call_operand.vmem [shape: f32[32,32], index: 9, kind: input, shape index: {}]
  %s10 = inlined_call_operand.vmem [shape: f32[1,32], index: 10, kind: input, shape index: {}]
  %s11 = inlined_call_operand.vmem [shape: f32[32,16], index: 11, kind: input, shape index: {}]
  %s12 = inlined_call_operand.vmem [shape: f32[32,16], index: 12, kind: input, shape index: {}]
  %s13 = inlined_call_operand.vmem [shape: f32[1,16], index: 13, kind: input, shape index: {}]
  %s14 = inlined_call_operand.vmem [shape: f32[64,16], index: 14, kind: output, shape index: {}]
  %s15 = sld [smem:[#allocation0]]
  $region66: #{sage_forward.1} parent=0
    _
  %s17 = ssub.s32 1, %s15
  %s18 = scalar_select 0, %s17, %s15
  // Predicated region
  $region2: #{sage_forward.1} parent=0 // pred_check
    _
  $region3: #{sage_forward.1} parent=0 // pred_check_branch
    %20 = sbr.rel (0) target = $region5
  $region4: #{sage_forward.1} parent=0 // pred_region
    _
  $region5: #{sage_forward.1} parent=0 // pred_fallthru
    _
  // Predicated region
  $region6: #{sage_forward.1} parent=0 // pred_check
    _
  $region7: #{sage_forward.1} parent=0 // pred_check_branch
    %22 = sbr.rel (0) target = $region9
  $region8: #{sage_forward.1} parent=0 // pred_region
    _
  $region9: #{sage_forward.1} parent=0 // pred_fallthru
    _
  // Predicated region
  $region10: #{sage_forward.1} parent=0 // pred_check
    _
  $region11: #{sage_forward.1} parent=0 // pred_check_branch
    %24 = sbr.rel (0) target = $region13
  $region12: #{sage_forward.1} parent=0 // pred_region
    _
  $region13: #{sage_forward.1} parent=0 // pred_fallthru
    _
  // Predicated region
  $region14: #{sage_forward.1} parent=0 // pred_check
    _
  $region15: #{sage_forward.1} parent=0 // pred_check_branch
    %26 = sbr.rel (0) target = $region17
  $region16: #{sage_forward.1} parent=0 // pred_region
    _
  $region17: #{sage_forward.1} parent=0 // pred_fallthru
    _
  // Predicated region
  $region18: #{sage_forward.1} parent=0 // pred_check
    _
  $region19: #{sage_forward.1} parent=0 // pred_check_branch
    %28 = sbr.rel (0) target = $region21
  $region20: #{sage_forward.1} parent=0 // pred_region
    _
  $region21: #{sage_forward.1} parent=0 // pred_fallthru
    _
  // Predicated region
  $region22: #{sage_forward.1} parent=0 // pred_check
    _
  $region23: #{sage_forward.1} parent=0 // pred_check_branch
    %30 = sbr.rel (0) target = $region25
  $region24: #{sage_forward.1} parent=0 // pred_region
    _
  $region25: #{sage_forward.1} parent=0 // pred_fallthru
    _
  // Predicated region
  $region26: #{sage_forward.1} parent=0 // pred_check
    _
  $region27: #{sage_forward.1} parent=0 // pred_check_branch
    %32 = sbr.rel (0) target = $region29
  $region28: #{sage_forward.1} parent=0 // pred_region
    _
  $region29: #{sage_forward.1} parent=0 // pred_fallthru
    _
  // Predicated region
  $region30: #{sage_forward.1} parent=0 // pred_check
    _
  $region31: #{sage_forward.1} parent=0 // pred_check_branch
    %34 = sbr.rel (0) target = $region33
  $region32: #{sage_forward.1} parent=0 // pred_region
    _
  $region33: #{sage_forward.1} parent=0 // pred_fallthru
    _
  // Predicated region
  $region34: #{sage_forward.1} parent=0 // pred_check
    _
  $region35: #{sage_forward.1} parent=0 // pred_check_branch
    %36 = sbr.rel (0) target = $region37
  $region36: #{sage_forward.1} parent=0 // pred_region
    _
  $region37: #{sage_forward.1} parent=0 // pred_fallthru
    _
  // Predicated region
  $region38: #{sage_forward.1} parent=0 // pred_check
    _
  $region39: #{sage_forward.1} parent=0 // pred_check_branch
    %38 = sbr.rel (0) target = $region41
  $region40: #{sage_forward.1} parent=0 // pred_region
    _
  $region41: #{sage_forward.1} parent=0 // pred_fallthru
    _
  // Predicated region
  $region42: #{sage_forward.1} parent=0 // pred_check
    _
  $region43: #{sage_forward.1} parent=0 // pred_check_branch
    %40 = sbr.rel (0) target = $region45
  $region44: #{sage_forward.1} parent=0 // pred_region
    _
  $region45: #{sage_forward.1} parent=0 // pred_fallthru
    _
  // Predicated region
  $region46: #{sage_forward.1} parent=0 // pred_check
    _
  $region47: #{sage_forward.1} parent=0 // pred_check_branch
    %42 = sbr.rel (0) target = $region49
  $region48: #{sage_forward.1} parent=0 // pred_region
    _
  $region49: #{sage_forward.1} parent=0 // pred_fallthru
    _
  // Predicated region
  $region50: #{sage_forward.1} parent=0 // pred_check
    _
  $region51: #{sage_forward.1} parent=0 // pred_check_branch
    %44 = sbr.rel (0) target = $region53
  $region52: #{sage_forward.1} parent=0 // pred_region
    _
  $region53: #{sage_forward.1} parent=0 // pred_fallthru
    _
  // Predicated region
  $region54: #{sage_forward.1} parent=0 // pred_check
    _
  $region55: #{sage_forward.1} parent=0 // pred_check_branch
    %46 = sbr.rel (0) target = $region57
  $region56: #{sage_forward.1} parent=0 // pred_region
    _
  $region57: #{sage_forward.1} parent=0 // pred_fallthru
    _
  %v47 = vld [vmem:[%s0] sm:$0xff]
  %v48 = vld [vmem:[%s0 + $0x8] sm:$0xff]
  %v49 = vld [vmem:[%s0 + $0x10] sm:$0xff]
  %v50 = vld [vmem:[%s0 + $0x18] sm:$0xff]
  %v51 = vld [vmem:[%s0 + $0x20] sm:$0xff]
  %v52 = vld [vmem:[%s0 + $0x28] sm:$0xff]
  %v53 = vld [vmem:[%s0 + $0x30] sm:$0xff]
  %v54 = vld [vmem:[%s0 + $0x38] sm:$0xff]
  %v55 = vld [vmem:[%s1] sm:$0xff]
  %v56 = vld [vmem:[%s1 + $0x8] sm:$0xff]
  %v57 = vld [vmem:[%s1 + $0x10] sm:$0xff]
  %v58 = vld [vmem:[%s1 + $0x18] sm:$0xff]
  %v59 = vld [vmem:[%s1 + $0x20] sm:$0xff]
  %v60 = vld [vmem:[%s1 + $0x28] sm:$0xff]
  %v61 = vld [vmem:[%s1 + $0x30] sm:$0xff]
  %v62 = vld [vmem:[%s1 + $0x38] sm:$0xff]
  %v63 = vld [vmem:[%s5] sm:$0xff]
  %v64 = vld [vmem:[%s5 + $0x8] sm:$0xff]
  %v65 = vld [vmem:[%s6] sm:$0xff]
  %v66 = vld [vmem:[%s6 + $0x8] sm:$0xff]
  %v67 = vld [vmem:[%s7] sm:$0x1]
  %vm68 = vcmask 523264
  %v70 = vsel %vm68, %v47, 0
  %v73 = vsel %vm68, %v48, 0
  %v76 = vsel %vm68, %v49, 0
  %v79 = vsel %vm68, %v50, 0
  %v82 = vsel %vm68, %v51, 0
  %v85 = vsel %vm68, %v52, 0
  %v88 = vsel %vm68, %v53, 0
  %v91 = vsel %vm68, %v54, 0
  %93 = vmatprep.subr.mxu0 0.0
  %94 = vmatpush1.msra.mxu0 %v55
  %95 = vmatprep.subr.mxu0 0.0
  %96 = vmatpush1.msra.mxu0 %v56
  %97 = vmatprep.subr.mxu0 0.0
  %98 = vmatpush1.msra.mxu0 %v57
  %99 = vmatprep.subr.mxu0 0.0
  %100 = vmatpush1.msra.mxu0 %v58
  %101 = vmatprep.subr.mxu0 0.0
  %102 = vmatpush1.msra.mxu0 %v59
  %103 = vmatprep.subr.mxu0 0.0
  %104 = vmatpush1.msra.mxu0 %v60
  %105 = vmatprep.subr.mxu0 0.0
  %106 = vmatpush1.msra.mxu0 %v61
  %107 = vmatprep.subr.mxu0 0.0
  %108 = vmatpush1.msra.mxu0 %v62
  %109 = vmatprep.subr.mxu0 0.0
  %110 = vmatpush1.msra.mxu0 0.0
  %111 = vmatprep.subr.mxu0 0.0
  %112 = vmatpush1.msra.mxu0 0.0
  %113 = vmatprep.subr.mxu0 0.0
  %114 = vmatpush1.msra.mxu0 0.0
  %115 = vmatprep.subr.mxu0 0.0
  %116 = vmatpush1.msra.mxu0 0.0
  %117 = vmatprep.subr.mxu0 0.0
  %118 = vmatpush1.msra.mxu0 0.0
  %119 = vmatprep.subr.mxu0 0.0
  %120 = vmatpush1.msra.mxu0 0.0
  %121 = vmatprep.subr.mxu0 0.0
  %122 = vmatpush1.msra.mxu0 0.0
  %123 = vmatprep.subr.mxu0 0.0
  %124 = vmatpush1.msra.mxu0 0.0
  %125 = vmatprep.subr.mxu0 0.0
  %126 = vmatpush1.msra.mxu0 0.0
  %127 = vmatprep.subr.mxu0 0.0
  %128 = vmatpush1.msra.mxu0 0.0
  %129 = vmatprep.subr.mxu0 0.0
  %130 = vmatpush1.msra.mxu0 0.0
  %131 = vmatprep.subr.mxu0 0.0
  %132 = vmatpush1.msra.mxu0 0.0
  %133 = vmatprep.subr.mxu0 0.0
  %134 = vmatpush1.msra.mxu0 0.0
  %135 = vmatprep.subr.mxu0 0.0
  %136 = vmatpush1.msra.mxu0 0.0
  %137 = vmatprep.subr.mxu0 0.0
  %138 = vmatpush1.msra.mxu0 0.0
  %139 = vmatprep.subr.mxu0 0.0
  %140 = vmatpush1.msra.mxu0 0.0
  %141 = vmatprep.subr.mxu0 0.0
  %142 = vmatpush1.msra.mxu0 0.0
  %143 = vmatprep.subr.mxu0 0.0
  %144 = vmatpush1.msra.mxu0 0.0
  %145 = vmatprep.subr.mxu0 0.0
  %146 = vmatpush1.msra.mxu0 0.0
  %147 = vmatprep.subr.mxu0 0.0
  %148 = vmatpush1.msra.mxu0 0.0
  %149 = vmatprep.subr.mxu0 0.0
  %150 = vmatpush1.msra.mxu0 0.0
  %151 = vmatprep.subr.mxu0 0.0
  %152 = vmatpush1.msra.mxu0 0.0
  %153 = vmatprep.subr.mxu0 0.0
  %154 = vmatpush1.msra.mxu0 0.0
  %155 = vmatprep.subr.mxu0 0.0
  %156 = vmatpush1.msra.mxu0 0.0
  %157 = vmatprep.mubr.f32.mxu0 0.0
  %158 = vmatmul.mubr.f32.gmra.mrb[0].mxu0 %v70
  %v159 = vpop.f32.mrb[0].mxu0
  %v160 = vadd.f32 0.0, %v159
  %v161 = vpop.f32.mrb[0].mxu0
  %162 = vmatprep.mubr.f32.mxu0 0.0
  %163 = vmatmul.mubr.f32.gmra.mrb[0].mxu0 %v73
  %v164 = vpop.f32.mrb[0].mxu0
  %v165 = vadd.f32 0.0, %v164
  %v166 = vpop.f32.mrb[0].mxu0
  %167 = vmatprep.mubr.f32.mxu0 0.0
  %168 = vmatmul.mubr.f32.gmra.mrb[0].mxu0 %v76
  %v169 = vpop.f32.mrb[0].mxu0
  %v170 = vadd.f32 0.0, %v169
  %v171 = vpop.f32.mrb[0].mxu0
  %172 = vmatprep.mubr.f32.mxu0 0.0
  %173 = vmatmul.mubr.f32.gmra.mrb[0].mxu0 %v79
  %v174 = vpop.f32.mrb[0].mxu0
  %v175 = vadd.f32 0.0, %v174
  %v176 = vpop.f32.mrb[0].mxu0
  %177 = vmatprep.mubr.f32.mxu0 0.0
  %178 = vmatmul.mubr.f32.gmra.mrb[0].mxu0 %v82
  %v179 = vpop.f32.mrb[0].mxu0
  %v180 = vadd.f32 0.0, %v179
  %v181 = vpop.f32.mrb[0].mxu0
  %182 = vmatprep.mubr.f32.mxu0 0.0
  %183 = vmatmul.mubr.f32.gmra.mrb[0].mxu0 %v85
  %v184 = vpop.f32.mrb[0].mxu0
  %v185 = vadd.f32 0.0, %v184
  %v186 = vpop.f32.mrb[0].mxu0
  %187 = vmatprep.mubr.f32.mxu0 0.0
  %188 = vmatmul.mubr.f32.gmra.mrb[0].mxu0 %v88
  %v189 = vpop.f32.mrb[0].mxu0
  %v190 = vadd.f32 0.0, %v189
  %v191 = vpop.f32.mrb[0].mxu0
  %192 = vmatprep.mubr.f32.mxu0 0.0
  %193 = vmatmul.mubr.f32.gmra.mrb[0].mxu0 %v91
  %v194 = vpop.f32.mrb[0].mxu0
  %v195 = vadd.f32 0.0, %v194
  %v196 = vpop.f32.mrb[0].mxu0
  %197 = vdwg.mxu0
  %vm198 = vcmask 130048
  %v200 = vsel %vm198, %v55, 0
  %v203 = vsel %vm198, %v56, 0
  %v206 = vsel %vm198, %v57, 0
  %v209 = vsel %vm198, %v58, 0
  %v212 = vsel %vm198, %v59, 0
  %v215 = vsel %vm198, %v60, 0
  %v218 = vsel %vm198, %v61, 0
  %v221 = vsel %vm198, %v62, 0
  %223 = vmatprep.subr.mxu0 0.0
  %224 = vmatpush1.msra.mxu0 %v65
  %225 = vmatprep.subr.mxu0 0.0
  %226 = vmatpush1.msra.mxu0 %v66
  %227 = vmatprep.subr.mxu0 0.0
  %228 = vmatpush1.msra.mxu0 0.0
  %229 = vmatprep.subr.mxu0 0.0
  %230 = vmatpush1.msra.mxu0 0.0
  %231 = vmatprep.subr.mxu0 0.0
  %232 = vmatpush1.msra.mxu0 0.0
  %233 = vmatprep.subr.mxu0 0.0
  %234 = vmatpush1.msra.mxu0 0.0
  %235 = vmatprep.subr.mxu0 0.0
  %236 = vmatpush1.msra.mxu0 0.0
  %237 = vmatprep.subr.mxu0 0.0
  %238 = vmatpush1.msra.mxu0 0.0
  %239 = vmatprep.subr.mxu0 0.0
  %240 = vmatpush1.msra.mxu0 0.0
  %241 = vmatprep.subr.mxu0 0.0
  %242 = vmatpush1.msra.mxu0 0.0
  %243 = vmatprep.subr.mxu0 0.0
  %244 = vmatpush1.msra.mxu0 0.0
  %245 = vmatprep.subr.mxu0 0.0
  %246 = vmatpush1.msra.mxu0 0.0
  %247 = vmatprep.subr.mxu0 0.0
  %248 = vmatpush1.msra.mxu0 0.0
  %249 = vmatprep.subr.mxu0 0.0
  %250 = vmatpush1.msra.mxu0 0.0
  %251 = vmatprep.subr.mxu0 0.0
  %252 = vmatpush1.msra.mxu0 0.0
  %253 = vmatprep.subr.mxu0 0.0
  %254 = vmatpush1.msra.mxu0 0.0
  %255 = vmatprep.subr.mxu0 0.0
  %256 = vmatpush1.msra.mxu0 0.0
  %257 = vmatprep.subr.mxu0 0.0
  %258 = vmatpush1.msra.mxu0 0.0
  %259 = vmatprep.subr.mxu0 0.0
  %260 = vmatpush1.msra.mxu0 0.0
  %261 = vmatprep.subr.mxu0 0.0
  %262 = vmatpush1.msra.mxu0 0.0
  %263 = vmatprep.subr.mxu0 0.0
  %264 = vmatpush1.msra.mxu0 0.0
  %265 = vmatprep.subr.mxu0 0.0
  %266 = vmatpush1.msra.mxu0 0.0
  %267 = vmatprep.subr.mxu0 0.0
  %268 = vmatpush1.msra.mxu0 0.0
  %269 = vmatprep.subr.mxu0 0.0
  %270 = vmatpush1.msra.mxu0 0.0
  %271 = vmatprep.subr.mxu0 0.0
  %272 = vmatpush1.msra.mxu0 0.0
  %273 = vmatprep.subr.mxu0 0.0
  %274 = vmatpush1.msra.mxu0 0.0
  %275 = vmatprep.subr.mxu0 0.0
  %276 = vmatpush1.msra.mxu0 0.0
  %277 = vmatprep.subr.mxu0 0.0
  %278 = vmatpush1.msra.mxu0 0.0
  %279 = vmatprep.subr.mxu0 0.0
  %280 = vmatpush1.msra.mxu0 0.0
  %281 = vmatprep.subr.mxu0 0.0
  %282 = vmatpush1.msra.mxu0 0.0
  %283 = vmatprep.subr.mxu0 0.0
  %284 = vmatpush1.msra.mxu0 0.0
  %285 = vmatprep.subr.mxu0 0.0
  %286 = vmatpush1.msra.mxu0 0.0
  %287 = vmatprep.mubr.f32.mxu0 0.0
  %288 = vmatmul.mubr.f32.gmra.mrb[0].mxu0 %v200
  %v289 = vpop.f32.mrb[0].mxu0
  %v290 = vadd.f32 0.0, %v289
  %v291 = vpop.f32.mrb[0].mxu0
  %292 = vmatprep.mubr.f32.mxu0 0.0
  %293 = vmatmul.mubr.f32.gmra.mrb[0].mxu0 %v203
  %v294 = vpop.f32.mrb[0].mxu0
  %v295 = vadd.f32 0.0, %v294
  %v296 = vpop.f32.mrb[0].mxu0
  %297 = vmatprep.mubr.f32.mxu0 0.0
  %298 = vmatmul.mubr.f32.gmra.mrb[0].mxu0 %v206
  %v299 = vpop.f32.mrb[0].mxu0
  %v300 = vadd.f32 0.0, %v299
  %v301 = vpop.f32.mrb[0].mxu0
  %302 = vmatprep.mubr.f32.mxu0 0.0
  %303 = vmatmul.mubr.f32.gmra.mrb[0].mxu0 %v209
  %v304 = vpop.f32.mrb[0].mxu0
  %v305 = vadd.f32 0.0, %v304
  %v306 = vpop.f32.mrb[0].mxu0
  %307 = vmatprep.mubr.f32.mxu0 0.0
  %308 = vmatmul.mubr.f32.gmra.mrb[0].mxu0 %v212
  %v309 = vpop.f32.mrb[0].mxu0
  %v310 = vadd.f32 0.0, %v309
  %v311 = vpop.f32.mrb[0].mxu0
  %312 = vmatprep.mubr.f32.mxu0 0.0
  %313 = vmatmul.mubr.f32.gmra.mrb[0].mxu0 %v215
  %v314 = vpop.f32.mrb[0].mxu0
  %v315 = vadd.f32 0.0, %v314
  %v316 = vpop.f32.mrb[0].mxu0
  %317 = vmatprep.mubr.f32.mxu0 0.0
  %318 = vmatmul.mubr.f32.gmra.mrb[0].mxu0 %v218
  %v319 = vpop.f32.mrb[0].mxu0
  %v320 = vadd.f32 0.0, %v319
  %v321 = vpop.f32.mrb[0].mxu0
  %322 = vmatprep.mubr.f32.mxu0 0.0
  %323 = vmatmul.mubr.f32.gmra.mrb[0].mxu0 %v221
  %v324 = vpop.f32.mrb[0].mxu0
  %v325 = vadd.f32 0.0, %v324
  %v326 = vpop.f32.mrb[0].mxu0
  %327 = vdwg.mxu0
  %v329 = vsel %vm198, %v160, 0
  %v332 = vsel %vm198, %v165, 0
  %v335 = vsel %vm198, %v170, 0
  %v338 = vsel %vm198, %v175, 0
  %v341 = vsel %vm198, %v180, 0
  %v344 = vsel %vm198, %v185, 0
  %v347 = vsel %vm198, %v190, 0
  %v350 = vsel %vm198, %v195, 0
  %352 = vmatprep.subr.mxu0 0.0
  %353 = vmatpush1.msra.mxu0 %v63
  %354 = vmatprep.subr.mxu0 0.0
  %355 = vmatpush1.msra.mxu0 %v64
  %356 = vmatprep.subr.mxu0 0.0
  %357 = vmatpush1.msra.mxu0 0.0
  %358 = vmatprep.subr.mxu0 0.0
  %359 = vmatpush1.msra.mxu0 0.0
  %360 = vmatprep.subr.mxu0 0.0
  %361 = vmatpush1.msra.mxu0 0.0
  %362 = vmatprep.subr.mxu0 0.0
  %363 = vmatpush1.msra.mxu0 0.0
  %364 = vmatprep.subr.mxu0 0.0
  %365 = vmatpush1.msra.mxu0 0.0
  %366 = vmatprep.subr.mxu0 0.0
  %367 = vmatpush1.msra.mxu0 0.0
  %368 = vmatprep.subr.mxu0 0.0
  %369 = vmatpush1.msra.mxu0 0.0
  %370 = vmatprep.subr.mxu0 0.0
  %371 = vmatpush1.msra.mxu0 0.0
  %372 = vmatprep.subr.mxu0 0.0
  %373 = vmatpush1.msra.mxu0 0.0
  %374 = vmatprep.subr.mxu0 0.0
  %375 = vmatpush1.msra.mxu0 0.0
  %376 = vmatprep.subr.mxu0 0.0
  %377 = vmatpush1.msra.mxu0 0.0
  %378 = vmatprep.subr.mxu0 0.0
  %379 = vmatpush1.msra.mxu0 0.0
  %380 = vmatprep.subr.mxu0 0.0
  %381 = vmatpush1.msra.mxu0 0.0
  %382 = vmatprep.subr.mxu0 0.0
  %383 = vmatpush1.msra.mxu0 0.0
  %384 = vmatprep.subr.mxu0 0.0
  %385 = vmatpush1.msra.mxu0 0.0
  %386 = vmatprep.subr.mxu0 0.0
  %387 = vmatpush1.msra.mxu0 0.0
  %388 = vmatprep.subr.mxu0 0.0
  %389 = vmatpush1.msra.mxu0 0.0
  %390 = vmatprep.subr.mxu0 0.0
  %391 = vmatpush1.msra.mxu0 0.0
  %392 = vmatprep.subr.mxu0 0.0
  %393 = vmatpush1.msra.mxu0 0.0
  %394 = vmatprep.subr.mxu0 0.0
  %395 = vmatpush1.msra.mxu0 0.0
  %396 = vmatprep.subr.mxu0 0.0
  %397 = vmatpush1.msra.mxu0 0.0
  %398 = vmatprep.subr.mxu0 0.0
  %399 = vmatpush1.msra.mxu0 0.0
  %400 = vmatprep.subr.mxu0 0.0
  %401 = vmatpush1.msra.mxu0 0.0
  %402 = vmatprep.subr.mxu0 0.0
  %403 = vmatpush1.msra.mxu0 0.0
  %404 = vmatprep.subr.mxu0 0.0
  %405 = vmatpush1.msra.mxu0 0.0
  %406 = vmatprep.subr.mxu0 0.0
  %407 = vmatpush1.msra.mxu0 0.0
  %408 = vmatprep.subr.mxu0 0.0
  %409 = vmatpush1.msra.mxu0 0.0
  %410 = vmatprep.subr.mxu0 0.0
  %411 = vmatpush1.msra.mxu0 0.0
  %412 = vmatprep.subr.mxu0 0.0
  %413 = vmatpush1.msra.mxu0 0.0
  %414 = vmatprep.subr.mxu0 0.0
  %415 = vmatpush1.msra.mxu0 0.0
  %416 = vmatprep.mubr.f32.mxu0 0.0
  %417 = vmatmul.mubr.f32.gmra.mrb[0].mxu0 %v329
  %v418 = vpop.f32.mrb[0].mxu0
  %v419 = vadd.f32 %v290, %v418
  %v420 = vpop.f32.mrb[0].mxu0
  %421 = vmatprep.mubr.f32.mxu0 0.0
  %422 = vmatmul.mubr.f32.gmra.mrb[0].mxu0 %v332
  %v423 = vpop.f32.mrb[0].mxu0
  %v424 = vadd.f32 %v295, %v423
  %v425 = vpop.f32.mrb[0].mxu0
  %426 = vmatprep.mubr.f32.mxu0 0.0
  %427 = vmatmul.mubr.f32.gmra.mrb[0].mxu0 %v335
  %v428 = vpop.f32.mrb[0].mxu0
  %v429 = vadd.f32 %v300, %v428
  %v430 = vpop.f32.mrb[0].mxu0
  %431 = vmatprep.mubr.f32.mxu0 0.0
  %432 = vmatmul.mubr.f32.gmra.mrb[0].mxu0 %v338
  %v433 = vpop.f32.mrb[0].mxu0
  %v434 = vadd.f32 %v305, %v433
  %v435 = vpop.f32.mrb[0].mxu0
  %436 = vmatprep.mubr.f32.mxu0 0.0
  %437 = vmatmul.mubr.f32.gmra.mrb[0].mxu0 %v341
  %v438 = vpop.f32.mrb[0].mxu0
  %v439 = vadd.f32 %v310, %v438
  %v440 = vpop.f32.mrb[0].mxu0
  %441 = vmatprep.mubr.f32.mxu0 0.0
  %442 = vmatmul.mubr.f32.gmra.mrb[0].mxu0 %v344
  %v443 = vpop.f32.mrb[0].mxu0
  %v444 = vadd.f32 %v315, %v443
  %v445 = vpop.f32.mrb[0].mxu0
  %446 = vmatprep.mubr.f32.mxu0 0.0
  %447 = vmatmul.mubr.f32.gmra.mrb[0].mxu0 %v347
  %v448 = vpop.f32.mrb[0].mxu0
  %v449 = vadd.f32 %v320, %v448
  %v450 = vpop.f32.mrb[0].mxu0
  %451 = vmatprep.mubr.f32.mxu0 0.0
  %452 = vmatmul.mubr.f32.gmra.mrb[0].mxu0 %v350
  %v453 = vpop.f32.mrb[0].mxu0
  %v454 = vadd.f32 %v325, %v453
  %v455 = vpop.f32.mrb[0].mxu0
  %456 = vdwg.mxu0
  %v458 = vlaneseq
  %v459 = vshrl.u32 %v458, 7
  %v460 = vsub.s32 0, %v459
  %v461 = vrot.slane %v67, %v460
  %v463 = vadd.f32 %v419, %v461
  %v464 = vadd.f32 %v424, %v461
  %v465 = vadd.f32 %v429, %v461
  %v466 = vadd.f32 %v434, %v461
  %v467 = vadd.f32 %v439, %v461
  %v468 = vadd.f32 %v444, %v461
  %v469 = vadd.f32 %v449, %v461
  %v470 = vadd.f32 %v454, %v461
  %v471 = vmax.f32 %v463, 0.0
  %v472 = vmax.f32 %v464, 0.0
  %v473 = vmax.f32 %v465, 0.0
  %v474 = vmax.f32 %v466, 0.0
  %v475 = vmax.f32 %v467, 0.0
  %v476 = vmax.f32 %v468, 0.0
  %v477 = vmax.f32 %v469, 0.0
  %v478 = vmax.f32 %v470, 0.0
  %v479 = vld [vmem:[%s8] sm:$0xff]
  %v480 = vld [vmem:[%s8 + $0x8] sm:$0xff]
  %v481 = vld [vmem:[%s8 + $0x10] sm:$0xff]
  %v482 = vld [vmem:[%s8 + $0x18] sm:$0xff]
  %v483 = vld [vmem:[%s9] sm:$0xff]
  %v484 = vld [vmem:[%s9 + $0x8] sm:$0xff]
  %v485 = vld [vmem:[%s9 + $0x10] sm:$0xff]
  %v486 = vld [vmem:[%s9 + $0x18] sm:$0xff]
  %v487 = vld [vmem:[%s10] sm:$0x1]
  %488 = vmatprep.subr.mxu0 0.0
  %489 = vmatpush1.msra.mxu0 %v471
  %490 = vmatprep.subr.mxu0 0.0
  %491 = vmatpush1.msra.mxu0 %v472
  %492 = vmatprep.subr.mxu0 0.0
  %493 = vmatpush1.msra.mxu0 %v473
  %494 = vmatprep.subr.mxu0 0.0
  %495 = vmatpush1.msra.mxu0 %v474
  %496 = vmatprep.subr.mxu0 0.0
  %497 = vmatpush1.msra.mxu0 %v475
  %498 = vmatprep.subr.mxu0 0.0
  %499 = vmatpush1.msra.mxu0 %v476
  %500 = vmatprep.subr.mxu0 0.0
  %501 = vmatpush1.msra.mxu0 %v477
  %502 = vmatprep.subr.mxu0 0.0
  %503 = vmatpush1.msra.mxu0 %v478
  %504 = vmatprep.subr.mxu0 0.0
  %505 = vmatpush1.msra.mxu0 0.0
  %506 = vmatprep.subr.mxu0 0.0
  %507 = vmatpush1.msra.mxu0 0.0
  %508 = vmatprep.subr.mxu0 0.0
  %509 = vmatpush1.msra.mxu0 0.0
  %510 = vmatprep.subr.mxu0 0.0
  %511 = vmatpush1.msra.mxu0 0.0
  %512 = vmatprep.subr.mxu0 0.0
  %513 = vmatpush1.msra.mxu0 0.0
  %514 = vmatprep.subr.mxu0 0.0
  %515 = vmatpush1.msra.mxu0 0.0
  %516 = vmatprep.subr.mxu0 0.0
  %517 = vmatpush1.msra.mxu0 0.0
  %518 = vmatprep.subr.mxu0 0.0
  %519 = vmatpush1.msra.mxu0 0.0
  %520 = vmatprep.subr.mxu0 0.0
  %521 = vmatpush1.msra.mxu0 0.0
  %522 = vmatprep.subr.mxu0 0.0
  %523 = vmatpush1.msra.mxu0 0.0
  %524 = vmatprep.subr.mxu0 0.0
  %525 = vmatpush1.msra.mxu0 0.0
  %526 = vmatprep.subr.mxu0 0.0
  %527 = vmatpush1.msra.mxu0 0.0
  %528 = vmatprep.subr.mxu0 0.0
  %529 = vmatpush1.msra.mxu0 0.0
  %530 = vmatprep.subr.mxu0 0.0
  %531 = vmatpush1.msra.mxu0 0.0
  %532 = vmatprep.subr.mxu0 0.0
  %533 = vmatpush1.msra.mxu0 0.0
  %534 = vmatprep.subr.mxu0 0.0
  %535 = vmatpush1.msra.mxu0 0.0
  %536 = vmatprep.subr.mxu0 0.0
  %537 = vmatpush1.msra.mxu0 0.0
  %538 = vmatprep.subr.mxu0 0.0
  %539 = vmatpush1.msra.mxu0 0.0
  %540 = vmatprep.subr.mxu0 0.0
  %541 = vmatpush1.msra.mxu0 0.0
  %542 = vmatprep.subr.mxu0 0.0
  %543 = vmatpush1.msra.mxu0 0.0
  %544 = vmatprep.subr.mxu0 0.0
  %545 = vmatpush1.msra.mxu0 0.0
  %546 = vmatprep.subr.mxu0 0.0
  %547 = vmatpush1.msra.mxu0 0.0
  %548 = vmatprep.subr.mxu0 0.0
  %549 = vmatpush1.msra.mxu0 0.0
  %550 = vmatprep.subr.mxu0 0.0
  %551 = vmatpush1.msra.mxu0 0.0
  %552 = vmatprep.mubr.f32.mxu0 0.0
  %553 = vmatmul.mubr.f32.gmra.mrb[0].mxu0 %v70
  %v554 = vpop.f32.mrb[0].mxu0
  %v555 = vadd.f32 0.0, %v554
  %v556 = vpop.f32.mrb[0].mxu0
  %557 = vmatprep.mubr.f32.mxu0 0.0
  %558 = vmatmul.mubr.f32.gmra.mrb[0].mxu0 %v73
  %v559 = vpop.f32.mrb[0].mxu0
  %v560 = vadd.f32 0.0, %v559
  %v561 = vpop.f32.mrb[0].mxu0
  %562 = vmatprep.mubr.f32.mxu0 0.0
  %563 = vmatmul.mubr.f32.gmra.mrb[0].mxu0 %v76
  %v564 = vpop.f32.mrb[0].mxu0
  %v565 = vadd.f32 0.0, %v564
  %v566 = vpop.f32.mrb[0].mxu0
  %567 = vmatprep.mubr.f32.mxu0 0.0
  %568 = vmatmul.mubr.f32.gmra.mrb[0].mxu0 %v79
  %v569 = vpop.f32.mrb[0].mxu0
  %v570 = vadd.f32 0.0, %v569
  %v571 = vpop.f32.mrb[0].mxu0
  %572 = vmatprep.mubr.f32.mxu0 0.0
  %573 = vmatmul.mubr.f32.gmra.mrb[0].mxu0 %v82
  %v574 = vpop.f32.mrb[0].mxu0
  %v575 = vadd.f32 0.0, %v574
  %v576 = vpop.f32.mrb[0].mxu0
  %577 = vmatprep.mubr.f32.mxu0 0.0
  %578 = vmatmul.mubr.f32.gmra.mrb[0].mxu0 %v85
  %v579 = vpop.f32.mrb[0].mxu0
  %v580 = vadd.f32 0.0, %v579
  %v581 = vpop.f32.mrb[0].mxu0
  %582 = vmatprep.mubr.f32.mxu0 0.0
  %583 = vmatmul.mubr.f32.gmra.mrb[0].mxu0 %v88
  %v584 = vpop.f32.mrb[0].mxu0
  %v585 = vadd.f32 0.0, %v584
  %v586 = vpop.f32.mrb[0].mxu0
  %587 = vmatprep.mubr.f32.mxu0 0.0
  %588 = vmatmul.mubr.f32.gmra.mrb[0].mxu0 %v91
  %v589 = vpop.f32.mrb[0].mxu0
  %v590 = vadd.f32 0.0, %v589
  %v591 = vpop.f32.mrb[0].mxu0
  %592 = vdwg.mxu0
  %vm593 = vcmask 261120
  %v595 = vsel %vm593, %v471, 0
  %v598 = vsel %vm593, %v472, 0
  %v601 = vsel %vm593, %v473, 0
  %v604 = vsel %vm593, %v474, 0
  %v607 = vsel %vm593, %v475, 0
  %v610 = vsel %vm593, %v476, 0
  %v613 = vsel %vm593, %v477, 0
  %v616 = vsel %vm593, %v478, 0
  %618 = vmatprep.subr.mxu0 0.0
  %619 = vmatpush1.msra.mxu0 %v483
  %620 = vmatprep.subr.mxu0 0.0
  %621 = vmatpush1.msra.mxu0 %v484
  %622 = vmatprep.subr.mxu0 0.0
  %623 = vmatpush1.msra.mxu0 %v485
  %624 = vmatprep.subr.mxu0 0.0
  %625 = vmatpush1.msra.mxu0 %v486
  %626 = vmatprep.subr.mxu0 0.0
  %627 = vmatpush1.msra.mxu0 0.0
  %628 = vmatprep.subr.mxu0 0.0
  %629 = vmatpush1.msra.mxu0 0.0
  %630 = vmatprep.subr.mxu0 0.0
  %631 = vmatpush1.msra.mxu0 0.0
  %632 = vmatprep.subr.mxu0 0.0
  %633 = vmatpush1.msra.mxu0 0.0
  %634 = vmatprep.subr.mxu0 0.0
  %635 = vmatpush1.msra.mxu0 0.0
  %636 = vmatprep.subr.mxu0 0.0
  %637 = vmatpush1.msra.mxu0 0.0
  %638 = vmatprep.subr.mxu0 0.0
  %639 = vmatpush1.msra.mxu0 0.0
  %640 = vmatprep.subr.mxu0 0.0
  %641 = vmatpush1.msra.mxu0 0.0
  %642 = vmatprep.subr.mxu0 0.0
  %643 = vmatpush1.msra.mxu0 0.0
  %644 = vmatprep.subr.mxu0 0.0
  %645 = vmatpush1.msra.mxu0 0.0
  %646 = vmatprep.subr.mxu0 0.0
  %647 = vmatpush1.msra.mxu0 0.0
  %648 = vmatprep.subr.mxu0 0.0
  %649 = vmatpush1.msra.mxu0 0.0
  %650 = vmatprep.subr.mxu0 0.0
  %651 = vmatpush1.msra.mxu0 0.0
  %652 = vmatprep.subr.mxu0 0.0
  %653 = vmatpush1.msra.mxu0 0.0
  %654 = vmatprep.subr.mxu0 0.0
  %655 = vmatpush1.msra.mxu0 0.0
  %656 = vmatprep.subr.mxu0 0.0
  %657 = vmatpush1.msra.mxu0 0.0
  %658 = vmatprep.subr.mxu0 0.0
  %659 = vmatpush1.msra.mxu0 0.0
  %660 = vmatprep.subr.mxu0 0.0
  %661 = vmatpush1.msra.mxu0 0.0
  %662 = vmatprep.subr.mxu0 0.0
  %663 = vmatpush1.msra.mxu0 0.0
  %664 = vmatprep.subr.mxu0 0.0
  %665 = vmatpush1.msra.mxu0 0.0
  %666 = vmatprep.subr.mxu0 0.0
  %667 = vmatpush1.msra.mxu0 0.0
  %668 = vmatprep.subr.mxu0 0.0
  %669 = vmatpush1.msra.mxu0 0.0
  %670 = vmatprep.subr.mxu0 0.0
  %671 = vmatpush1.msra.mxu0 0.0
  %672 = vmatprep.subr.mxu0 0.0
  %673 = vmatpush1.msra.mxu0 0.0
  %674 = vmatprep.subr.mxu0 0.0
  %675 = vmatpush1.msra.mxu0 0.0
  %676 = vmatprep.subr.mxu0 0.0
  %677 = vmatpush1.msra.mxu0 0.0
  %678 = vmatprep.subr.mxu0 0.0
  %679 = vmatpush1.msra.mxu0 0.0
  %680 = vmatprep.subr.mxu0 0.0
  %681 = vmatpush1.msra.mxu0 0.0
  %682 = vmatprep.mubr.f32.mxu0 0.0
  %683 = vmatmul.mubr.f32.gmra.mrb[0].mxu0 %v595
  %v684 = vpop.f32.mrb[0].mxu0
  %v685 = vadd.f32 0.0, %v684
  %v686 = vpop.f32.mrb[0].mxu0
  %687 = vmatprep.mubr.f32.mxu0 0.0
  %688 = vmatmul.mubr.f32.gmra.mrb[0].mxu0 %v598
  %v689 = vpop.f32.mrb[0].mxu0
  %v690 = vadd.f32 0.0, %v689
  %v691 = vpop.f32.mrb[0].mxu0
  %692 = vmatprep.mubr.f32.mxu0 0.0
  %693 = vmatmul.mubr.f32.gmra.mrb[0].mxu0 %v601
  %v694 = vpop.f32.mrb[0].mxu0
  %v695 = vadd.f32 0.0, %v694
  %v696 = vpop.f32.mrb[0].mxu0
  %697 = vmatprep.mubr.f32.mxu0 0.0
  %698 = vmatmul.mubr.f32.gmra.mrb[0].mxu0 %v604
  %v699 = vpop.f32.mrb[0].mxu0
  %v700 = vadd.f32 0.0, %v699
  %v701 = vpop.f32.mrb[0].mxu0
  %702 = vmatprep.mubr.f32.mxu0 0.0
  %703 = vmatmul.mubr.f32.gmra.mrb[0].mxu0 %v607
  %v704 = vpop.f32.mrb[0].mxu0
  %v705 = vadd.f32 0.0, %v704
  %v706 = vpop.f32.mrb[0].mxu0
  %707 = vmatprep.mubr.f32.mxu0 0.0
  %708 = vmatmul.mubr.f32.gmra.mrb[0].mxu0 %v610
  %v709 = vpop.f32.mrb[0].mxu0
  %v710 = vadd.f32 0.0, %v709
  %v711 = vpop.f32.mrb[0].mxu0
  %712 = vmatprep.mubr.f32.mxu0 0.0
  %713 = vmatmul.mubr.f32.gmra.mrb[0].mxu0 %v613
  %v714 = vpop.f32.mrb[0].mxu0
  %v715 = vadd.f32 0.0, %v714
  %v716 = vpop.f32.mrb[0].mxu0
  %717 = vmatprep.mubr.f32.mxu0 0.0
  %718 = vmatmul.mubr.f32.gmra.mrb[0].mxu0 %v616
  %v719 = vpop.f32.mrb[0].mxu0
  %v720 = vadd.f32 0.0, %v719
  %v721 = vpop.f32.mrb[0].mxu0
  %722 = vdwg.mxu0
  %v724 = vsel %vm593, %v555, 0
  %v727 = vsel %vm593, %v560, 0
  %v730 = vsel %vm593, %v565, 0
  %v733 = vsel %vm593, %v570, 0
  %v736 = vsel %vm593, %v575, 0
  %v739 = vsel %vm593, %v580, 0
  %v742 = vsel %vm593, %v585, 0
  %v745 = vsel %vm593, %v590, 0
  %747 = vmatprep.subr.mxu0 0.0
  %748 = vmatpush1.msra.mxu0 %v479
  %749 = vmatprep.subr.mxu0 0.0
  %750 = vmatpush1.msra.mxu0 %v480
  %751 = vmatprep.subr.mxu0 0.0
  %752 = vmatpush1.msra.mxu0 %v481
  %753 = vmatprep.subr.mxu0 0.0
  %754 = vmatpush1.msra.mxu0 %v482
  %755 = vmatprep.subr.mxu0 0.0
  %756 = vmatpush1.msra.mxu0 0.0
  %757 = vmatprep.subr.mxu0 0.0
  %758 = vmatpush1.msra.mxu0 0.0
  %759 = vmatprep.subr.mxu0 0.0
  %760 = vmatpush1.msra.mxu0 0.0
  %761 = vmatprep.subr.mxu0 0.0
  %762 = vmatpush1.msra.mxu0 0.0
  %763 = vmatprep.subr.mxu0 0.0
  %764 = vmatpush1.msra.mxu0 0.0
  %765 = vmatprep.subr.mxu0 0.0
  %766 = vmatpush1.msra.mxu0 0.0
  %767 = vmatprep.subr.mxu0 0.0
  %768 = vmatpush1.msra.mxu0 0.0
  %769 = vmatprep.subr.mxu0 0.0
  %770 = vmatpush1.msra.mxu0 0.0
  %771 = vmatprep.subr.mxu0 0.0
  %772 = vmatpush1.msra.mxu0 0.0
  %773 = vmatprep.subr.mxu0 0.0
  %774 = vmatpush1.msra.mxu0 0.0
  %775 = vmatprep.subr.mxu0 0.0
  %776 = vmatpush1.msra.mxu0 0.0
  %777 = vmatprep.subr.mxu0 0.0
  %778 = vmatpush1.msra.mxu0 0.0
  %779 = vmatprep.subr.mxu0 0.0
  %780 = vmatpush1.msra.mxu0 0.0
  %781 = vmatprep.subr.mxu0 0.0
  %782 = vmatpush1.msra.mxu0 0.0
  %783 = vmatprep.subr.mxu0 0.0
  %784 = vmatpush1.msra.mxu0 0.0
  %785 = vmatprep.subr.mxu0 0.0
  %786 = vmatpush1.msra.mxu0 0.0
  %787 = vmatprep.subr.mxu0 0.0
  %788 = vmatpush1.msra.mxu0 0.0
  %789 = vmatprep.subr.mxu0 0.0
  %790 = vmatpush1.msra.mxu0 0.0
  %791 = vmatprep.subr.mxu0 0.0
  %792 = vmatpush1.msra.mxu0 0.0
  %793 = vmatprep.subr.mxu0 0.0
  %794 = vmatpush1.msra.mxu0 0.0
  %795 = vmatprep.subr.mxu0 0.0
  %796 = vmatpush1.msra.mxu0 0.0
  %797 = vmatprep.subr.mxu0 0.0
  %798 = vmatpush1.msra.mxu0 0.0
  %799 = vmatprep.subr.mxu0 0.0
  %800 = vmatpush1.msra.mxu0 0.0
  %801 = vmatprep.subr.mxu0 0.0
  %802 = vmatpush1.msra.mxu0 0.0
  %803 = vmatprep.subr.mxu0 0.0
  %804 = vmatpush1.msra.mxu0 0.0
  %805 = vmatprep.subr.mxu0 0.0
  %806 = vmatpush1.msra.mxu0 0.0
  %807 = vmatprep.subr.mxu0 0.0
  %808 = vmatpush1.msra.mxu0 0.0
  %809 = vmatprep.subr.mxu0 0.0
  %810 = vmatpush1.msra.mxu0 0.0
  %811 = vmatprep.mubr.f32.mxu0 0.0
  %812 = vmatmul.mubr.f32.gmra.mrb[0].mxu0 %v724
  %v813 = vpop.f32.mrb[0].mxu0
  %v814 = vadd.f32 %v685, %v813
  %v815 = vpop.f32.mrb[0].mxu0
  %816 = vmatprep.mubr.f32.mxu0 0.0
  %817 = vmatmul.mubr.f32.gmra.mrb[0].mxu0 %v727
  %v818 = vpop.f32.mrb[0].mxu0
  %v819 = vadd.f32 %v690, %v818
  %v820 = vpop.f32.mrb[0].mxu0
  %821 = vmatprep.mubr.f32.mxu0 0.0
  %822 = vmatmul.mubr.f32.gmra.mrb[0].mxu0 %v730
  %v823 = vpop.f32.mrb[0].mxu0
  %v824 = vadd.f32 %v695, %v823
  %v825 = vpop.f32.mrb[0].mxu0
  %826 = vmatprep.mubr.f32.mxu0 0.0
  %827 = vmatmul.mubr.f32.gmra.mrb[0].mxu0 %v733
  %v828 = vpop.f32.mrb[0].mxu0
  %v829 = vadd.f32 %v700, %v828
  %v830 = vpop.f32.mrb[0].mxu0
  %831 = vmatprep.mubr.f32.mxu0 0.0
  %832 = vmatmul.mubr.f32.gmra.mrb[0].mxu0 %v736
  %v833 = vpop.f32.mrb[0].mxu0
  %v834 = vadd.f32 %v705, %v833
  %v835 = vpop.f32.mrb[0].mxu0
  %836 = vmatprep.mubr.f32.mxu0 0.0
  %837 = vmatmul.mubr.f32.gmra.mrb[0].mxu0 %v739
  %v838 = vpop.f32.mrb[0].mxu0
  %v839 = vadd.f32 %v710, %v838
  %v840 = vpop.f32.mrb[0].mxu0
  %841 = vmatprep.mubr.f32.mxu0 0.0
  %842 = vmatmul.mubr.f32.gmra.mrb[0].mxu0 %v742
  %v843 = vpop.f32.mrb[0].mxu0
  %v844 = vadd.f32 %v715, %v843
  %v845 = vpop.f32.mrb[0].mxu0
  %846 = vmatprep.mubr.f32.mxu0 0.0
  %847 = vmatmul.mubr.f32.gmra.mrb[0].mxu0 %v745
  %v848 = vpop.f32.mrb[0].mxu0
  %v849 = vadd.f32 %v720, %v848
  %v850 = vpop.f32.mrb[0].mxu0
  %851 = vdwg.mxu0
  %v853 = vlaneseq
  %v854 = vshrl.u32 %v853, 7
  %v855 = vsub.s32 0, %v854
  %v856 = vrot.slane %v487, %v855
  %v858 = vadd.f32 %v814, %v856
  %v859 = vadd.f32 %v819, %v856
  %v860 = vadd.f32 %v824, %v856
  %v861 = vadd.f32 %v829, %v856
  %v862 = vadd.f32 %v834, %v856
  %v863 = vadd.f32 %v839, %v856
  %v864 = vadd.f32 %v844, %v856
  %v865 = vadd.f32 %v849, %v856
  %v866 = vmax.f32 %v858, 0.0
  %v867 = vmax.f32 %v859, 0.0
  %v868 = vmax.f32 %v860, 0.0
  %v869 = vmax.f32 %v861, 0.0
  %v870 = vmax.f32 %v862, 0.0
  %v871 = vmax.f32 %v863, 0.0
  %v872 = vmax.f32 %v864, 0.0
  %v873 = vmax.f32 %v865, 0.0
  %v874 = vld [vmem:[%s2] sm:$0xff]
  %v875 = vld [vmem:[%s2 + $0x8] sm:$0xff]
  %v876 = vld [vmem:[%s2 + $0x10] sm:$0xff]
  %v877 = vld [vmem:[%s2 + $0x18] sm:$0xff]
  %v879 = vsel %vm68, %v874, 0
  %v882 = vsel %vm68, %v875, 0
  %v885 = vsel %vm68, %v876, 0
  %v888 = vsel %vm68, %v877, 0
  %890 = vmatprep.subr.mxu0 0.0
  %891 = vmatpush1.msra.mxu0 %v866
  %892 = vmatprep.subr.mxu0 0.0
  %893 = vmatpush1.msra.mxu0 %v867
  %894 = vmatprep.subr.mxu0 0.0
  %895 = vmatpush1.msra.mxu0 %v868
  %896 = vmatprep.subr.mxu0 0.0
  %897 = vmatpush1.msra.mxu0 %v869
  %898 = vmatprep.subr.mxu0 0.0
  %899 = vmatpush1.msra.mxu0 %v870
  %900 = vmatprep.subr.mxu0 0.0
  %901 = vmatpush1.msra.mxu0 %v871
  %902 = vmatprep.subr.mxu0 0.0
  %903 = vmatpush1.msra.mxu0 %v872
  %904 = vmatprep.subr.mxu0 0.0
  %905 = vmatpush1.msra.mxu0 %v873
  %906 = vmatprep.subr.mxu0 0.0
  %907 = vmatpush1.msra.mxu0 0.0
  %908 = vmatprep.subr.mxu0 0.0
  %909 = vmatpush1.msra.mxu0 0.0
  %910 = vmatprep.subr.mxu0 0.0
  %911 = vmatpush1.msra.mxu0 0.0
  %912 = vmatprep.subr.mxu0 0.0
  %913 = vmatpush1.msra.mxu0 0.0
  %914 = vmatprep.subr.mxu0 0.0
  %915 = vmatpush1.msra.mxu0 0.0
  %916 = vmatprep.subr.mxu0 0.0
  %917 = vmatpush1.msra.mxu0 0.0
  %918 = vmatprep.subr.mxu0 0.0
  %919 = vmatpush1.msra.mxu0 0.0
  %920 = vmatprep.subr.mxu0 0.0
  %921 = vmatpush1.msra.mxu0 0.0
  %922 = vmatprep.subr.mxu0 0.0
  %923 = vmatpush1.msra.mxu0 0.0
  %924 = vmatprep.subr.mxu0 0.0
  %925 = vmatpush1.msra.mxu0 0.0
  %926 = vmatprep.subr.mxu0 0.0
  %927 = vmatpush1.msra.mxu0 0.0
  %928 = vmatprep.subr.mxu0 0.0
  %929 = vmatpush1.msra.mxu0 0.0
  %930 = vmatprep.subr.mxu0 0.0
  %931 = vmatpush1.msra.mxu0 0.0
  %932 = vmatprep.subr.mxu0 0.0
  %933 = vmatpush1.msra.mxu0 0.0
  %934 = vmatprep.subr.mxu0 0.0
  %935 = vmatpush1.msra.mxu0 0.0
  %936 = vmatprep.subr.mxu0 0.0
  %937 = vmatpush1.msra.mxu0 0.0
  %938 = vmatprep.subr.mxu0 0.0
  %939 = vmatpush1.msra.mxu0 0.0
  %940 = vmatprep.subr.mxu0 0.0
  %941 = vmatpush1.msra.mxu0 0.0
  %942 = vmatprep.subr.mxu0 0.0
  %943 = vmatpush1.msra.mxu0 0.0
  %944 = vmatprep.subr.mxu0 0.0
  %945 = vmatpush1.msra.mxu0 0.0
  %946 = vmatprep.subr.mxu0 0.0
  %947 = vmatpush1.msra.mxu0 0.0
  %948 = vmatprep.subr.mxu0 0.0
  %949 = vmatpush1.msra.mxu0 0.0
  %950 = vmatprep.subr.mxu0 0.0
  %951 = vmatpush1.msra.mxu0 0.0
  %952 = vmatprep.subr.mxu0 0.0
  %953 = vmatpush1.msra.mxu0 0.0
  %954 = vmatprep.mubr.f32.mxu0 0.0
  %955 = vmatmul.mubr.f32.gmra.mrb[0].mxu0 %v879
  %v956 = vpop.f32.mrb[0].mxu0
  %v957 = vadd.f32 0.0, %v956
  %v958 = vpop.f32.mrb[0].mxu0
  %959 = vmatprep.mubr.f32.mxu0 0.0
  %960 = vmatmul.mubr.f32.gmra.mrb[0].mxu0 %v882
  %v961 = vpop.f32.mrb[0].mxu0
  %v962 = vadd.f32 0.0, %v961
  %v963 = vpop.f32.mrb[0].mxu0
  %964 = vmatprep.mubr.f32.mxu0 0.0
  %965 = vmatmul.mubr.f32.gmra.mrb[0].mxu0 %v885
  %v966 = vpop.f32.mrb[0].mxu0
  %v967 = vadd.f32 0.0, %v966
  %v968 = vpop.f32.mrb[0].mxu0
  %969 = vmatprep.mubr.f32.mxu0 0.0
  %970 = vmatmul.mubr.f32.gmra.mrb[0].mxu0 %v888
  %v971 = vpop.f32.mrb[0].mxu0
  %v972 = vadd.f32 0.0, %v971
  %v973 = vpop.f32.mrb[0].mxu0
  %974 = vdwg.mxu0
  %v975 = vld [vmem:[%s3] sm:$0xff]
  %v977 = vsel %vm593, %v975, 0
  %979 = vmatprep.subr.mxu0 0.0
  %980 = vmatpush1.msra.mxu0 %v957
  %981 = vmatprep.subr.mxu0 0.0
  %982 = vmatpush1.msra.mxu0 %v962
  %983 = vmatprep.subr.mxu0 0.0
  %984 = vmatpush1.msra.mxu0 %v967
  %985 = vmatprep.subr.mxu0 0.0
  %986 = vmatpush1.msra.mxu0 %v972
  %987 = vmatprep.subr.mxu0 0.0
  %988 = vmatpush1.msra.mxu0 0.0
  %989 = vmatprep.subr.mxu0 0.0
  %990 = vmatpush1.msra.mxu0 0.0
  %991 = vmatprep.subr.mxu0 0.0
  %992 = vmatpush1.msra.mxu0 0.0
  %993 = vmatprep.subr.mxu0 0.0
  %994 = vmatpush1.msra.mxu0 0.0
  %995 = vmatprep.subr.mxu0 0.0
  %996 = vmatpush1.msra.mxu0 0.0
  %997 = vmatprep.subr.mxu0 0.0
  %998 = vmatpush1.msra.mxu0 0.0
  %999 = vmatprep.subr.mxu0 0.0
  %1000 = vmatpush1.msra.mxu0 0.0
  %1001 = vmatprep.subr.mxu0 0.0
  %1002 = vmatpush1.msra.mxu0 0.0
  %1003 = vmatprep.subr.mxu0 0.0
  %1004 = vmatpush1.msra.mxu0 0.0
  %1005 = vmatprep.subr.mxu0 0.0
  %1006 = vmatpush1.msra.mxu0 0.0
  %1007 = vmatprep.subr.mxu0 0.0
  %1008 = vmatpush1.msra.mxu0 0.0
  %1009 = vmatprep.subr.mxu0 0.0
  %1010 = vmatpush1.msra.mxu0 0.0
  %1011 = vmatprep.subr.mxu0 0.0
  %1012 = vmatpush1.msra.mxu0 0.0
  %1013 = vmatprep.subr.mxu0 0.0
  %1014 = vmatpush1.msra.mxu0 0.0
  %1015 = vmatprep.subr.mxu0 0.0
  %1016 = vmatpush1.msra.mxu0 0.0
  %1017 = vmatprep.subr.mxu0 0.0
  %1018 = vmatpush1.msra.mxu0 0.0
  %1019 = vmatprep.subr.mxu0 0.0
  %1020 = vmatpush1.msra.mxu0 0.0
  %1021 = vmatprep.subr.mxu0 0.0
  %1022 = vmatpush1.msra.mxu0 0.0
  %1023 = vmatprep.subr.mxu0 0.0
  %1024 = vmatpush1.msra.mxu0 0.0
  %1025 = vmatprep.subr.mxu0 0.0
  %1026 = vmatpush1.msra.mxu0 0.0
  %1027 = vmatprep.subr.mxu0 0.0
  %1028 = vmatpush1.msra.mxu0 0.0
  %1029 = vmatprep.subr.mxu0 0.0
  %1030 = vmatpush1.msra.mxu0 0.0
  %1031 = vmatprep.subr.mxu0 0.0
  %1032 = vmatpush1.msra.mxu0 0.0
  %1033 = vmatprep.subr.mxu0 0.0
  %1034 = vmatpush1.msra.mxu0 0.0
  %1035 = vmatprep.subr.mxu0 0.0
  %1036 = vmatpush1.msra.mxu0 0.0
  %1037 = vmatprep.subr.mxu0 0.0
  %1038 = vmatpush1.msra.mxu0 0.0
  %1039 = vmatprep.subr.mxu0 0.0
  %1040 = vmatpush1.msra.mxu0 0.0
  %1041 = vmatprep.subr.mxu0 0.0
  %1042 = vmatpush1.msra.mxu0 0.0
  %1043 = vmatprep.mubr.f32.mxu0 0.0
  %1044 = vmatmul.mubr.f32.gmra.mrb[0].mxu0 %v977
  %v1045 = vpop.f32.mrb[0].mxu0
  %v1046 = vadd.f32 0.0, %v1045
  %v1047 = vpop.f32.mrb[0].mxu0
  %1048 = vdwg.mxu0
  %v1049 = vld [vmem:[%s4] sm:$0xff]
  %v1050 = vld [vmem:[%s4 + $0x8] sm:$0xff]
  %v1051 = vld [vmem:[%s4 + $0x10] sm:$0xff]
  %v1052 = vld [vmem:[%s4 + $0x18] sm:$0xff]
  %vm1053 = vcmask 64512
  %v1055 = vsel %vm1053, %v1049, 0
  %v1058 = vsel %vm1053, %v1050, 0
  %v1061 = vsel %vm1053, %v1051, 0
  %v1064 = vsel %vm1053, %v1052, 0
  %1066 = vmatprep.subr.mxu0 0.0
  %1067 = vmatpush1.msra.mxu0 %v1046
  %1068 = vmatprep.subr.mxu0 0.0
  %1069 = vmatpush1.msra.mxu0 0.0
  %1070 = vmatprep.subr.mxu0 0.0
  %1071 = vmatpush1.msra.mxu0 0.0
  %1072 = vmatprep.subr.mxu0 0.0
  %1073 = vmatpush1.msra.mxu0 0.0
  %1074 = vmatprep.subr.mxu0 0.0
  %1075 = vmatpush1.msra.mxu0 0.0
  %1076 = vmatprep.subr.mxu0 0.0
  %1077 = vmatpush1.msra.mxu0 0.0
  %1078 = vmatprep.subr.mxu0 0.0
  %1079 = vmatpush1.msra.mxu0 0.0
  %1080 = vmatprep.subr.mxu0 0.0
  %1081 = vmatpush1.msra.mxu0 0.0
  %1082 = vmatprep.subr.mxu0 0.0
  %1083 = vmatpush1.msra.mxu0 0.0
  %1084 = vmatprep.subr.mxu0 0.0
  %1085 = vmatpush1.msra.mxu0 0.0
  %1086 = vmatprep.subr.mxu0 0.0
  %1087 = vmatpush1.msra.mxu0 0.0
  %1088 = vmatprep.subr.mxu0 0.0
  %1089 = vmatpush1.msra.mxu0 0.0
  %1090 = vmatprep.subr.mxu0 0.0
  %1091 = vmatpush1.msra.mxu0 0.0
  %1092 = vmatprep.subr.mxu0 0.0
  %1093 = vmatpush1.msra.mxu0 0.0
  %1094 = vmatprep.subr.mxu0 0.0
  %1095 = vmatpush1.msra.mxu0 0.0
  %1096 = vmatprep.subr.mxu0 0.0
  %1097 = vmatpush1.msra.mxu0 0.0
  %1098 = vmatprep.subr.mxu0 0.0
  %1099 = vmatpush1.msra.mxu0 0.0
  %1100 = vmatprep.subr.mxu0 0.0
  %1101 = vmatpush1.msra.mxu0 0.0
  %1102 = vmatprep.subr.mxu0 0.0
  %1103 = vmatpush1.msra.mxu0 0.0
  %1104 = vmatprep.subr.mxu0 0.0
  %1105 = vmatpush1.msra.mxu0 0.0
  %1106 = vmatprep.subr.mxu0 0.0
  %1107 = vmatpush1.msra.mxu0 0.0
  %1108 = vmatprep.subr.mxu0 0.0
  %1109 = vmatpush1.msra.mxu0 0.0
  %1110 = vmatprep.subr.mxu0 0.0
  %1111 = vmatpush1.msra.mxu0 0.0
  %1112 = vmatprep.subr.mxu0 0.0
  %1113 = vmatpush1.msra.mxu0 0.0
  %1114 = vmatprep.subr.mxu0 0.0
  %1115 = vmatpush1.msra.mxu0 0.0
  %1116 = vmatprep.subr.mxu0 0.0
  %1117 = vmatpush1.msra.mxu0 0.0
  %1118 = vmatprep.subr.mxu0 0.0
  %1119 = vmatpush1.msra.mxu0 0.0
  %1120 = vmatprep.subr.mxu0 0.0
  %1121 = vmatpush1.msra.mxu0 0.0
  %1122 = vmatprep.subr.mxu0 0.0
  %1123 = vmatpush1.msra.mxu0 0.0
  %1124 = vmatprep.subr.mxu0 0.0
  %1125 = vmatpush1.msra.mxu0 0.0
  %1126 = vmatprep.subr.mxu0 0.0
  %1127 = vmatpush1.msra.mxu0 0.0
  %1128 = vmatprep.subr.mxu0 0.0
  %1129 = vmatpush1.msra.mxu0 0.0
  %1130 = vmatprep.mubr.f32.mxu0 0.0
  %1131 = vmatmul.mubr.f32.gmra.mrb[0].mxu0 %v1055
  %v1132 = vpop.f32.mrb[0].mxu0
  %v1133 = vadd.f32 0.0, %v1132
  %v1134 = vpop.f32.mrb[0].mxu0
  %1135 = vmatprep.mubr.f32.mxu0 0.0
  %1136 = vmatmul.mubr.f32.gmra.mrb[0].mxu0 %v1058
  %v1137 = vpop.f32.mrb[0].mxu0
  %v1138 = vadd.f32 0.0, %v1137
  %v1139 = vpop.f32.mrb[0].mxu0
  %1140 = vmatprep.mubr.f32.mxu0 0.0
  %1141 = vmatmul.mubr.f32.gmra.mrb[0].mxu0 %v1061
  %v1142 = vpop.f32.mrb[0].mxu0
  %v1143 = vadd.f32 0.0, %v1142
  %v1144 = vpop.f32.mrb[0].mxu0
  %1145 = vmatprep.mubr.f32.mxu0 0.0
  %1146 = vmatmul.mubr.f32.gmra.mrb[0].mxu0 %v1064
  %v1147 = vpop.f32.mrb[0].mxu0
  %v1148 = vadd.f32 0.0, %v1147
  %v1149 = vpop.f32.mrb[0].mxu0
  %1150 = vdwg.mxu0
  %v1151 = vld [vmem:[%s11] sm:$0xff]
  %v1152 = vld [vmem:[%s11 + $0x8] sm:$0xff]
  %v1153 = vld [vmem:[%s11 + $0x10] sm:$0xff]
  %v1154 = vld [vmem:[%s11 + $0x18] sm:$0xff]
  %v1155 = vld [vmem:[%s12] sm:$0xff]
  %v1156 = vld [vmem:[%s12 + $0x8] sm:$0xff]
  %v1157 = vld [vmem:[%s12 + $0x10] sm:$0xff]
  %v1158 = vld [vmem:[%s12 + $0x18] sm:$0xff]
  %v1159 = vld [vmem:[%s13] sm:$0x1]
  %v1161 = vsel %vm593, %v1133, 0
  %v1164 = vsel %vm593, %v1138, 0
  %v1167 = vsel %vm593, %v1143, 0
  %v1170 = vsel %vm593, %v1148, 0
  %1172 = vmatprep.subr.mxu0 0.0
  %1173 = vmatpush1.msra.mxu0 %v1155
  %1174 = vmatprep.subr.mxu0 0.0
  %1175 = vmatpush1.msra.mxu0 %v1156
  %1176 = vmatprep.subr.mxu0 0.0
  %1177 = vmatpush1.msra.mxu0 %v1157
  %1178 = vmatprep.subr.mxu0 0.0
  %1179 = vmatpush1.msra.mxu0 %v1158
  %1180 = vmatprep.subr.mxu0 0.0
  %1181 = vmatpush1.msra.mxu0 0.0
  %1182 = vmatprep.subr.mxu0 0.0
  %1183 = vmatpush1.msra.mxu0 0.0
  %1184 = vmatprep.subr.mxu0 0.0
  %1185 = vmatpush1.msra.mxu0 0.0
  %1186 = vmatprep.subr.mxu0 0.0
  %1187 = vmatpush1.msra.mxu0 0.0
  %1188 = vmatprep.subr.mxu0 0.0
  %1189 = vmatpush1.msra.mxu0 0.0
  %1190 = vmatprep.subr.mxu0 0.0
  %1191 = vmatpush1.msra.mxu0 0.0
  %1192 = vmatprep.subr.mxu0 0.0
  %1193 = vmatpush1.msra.mxu0 0.0
  %1194 = vmatprep.subr.mxu0 0.0
  %1195 = vmatpush1.msra.mxu0 0.0
  %1196 = vmatprep.subr.mxu0 0.0
  %1197 = vmatpush1.msra.mxu0 0.0
  %1198 = vmatprep.subr.mxu0 0.0
  %1199 = vmatpush1.msra.mxu0 0.0
  %1200 = vmatprep.subr.mxu0 0.0
  %1201 = vmatpush1.msra.mxu0 0.0
  %1202 = vmatprep.subr.mxu0 0.0
  %1203 = vmatpush1.msra.mxu0 0.0
  %1204 = vmatprep.subr.mxu0 0.0
  %1205 = vmatpush1.msra.mxu0 0.0
  %1206 = vmatprep.subr.mxu0 0.0
  %1207 = vmatpush1.msra.mxu0 0.0
  %1208 = vmatprep.subr.mxu0 0.0
  %1209 = vmatpush1.msra.mxu0 0.0
  %1210 = vmatprep.subr.mxu0 0.0
  %1211 = vmatpush1.msra.mxu0 0.0
  %1212 = vmatprep.subr.mxu0 0.0
  %1213 = vmatpush1.msra.mxu0 0.0
  %1214 = vmatprep.subr.mxu0 0.0
  %1215 = vmatpush1.msra.mxu0 0.0
  %1216 = vmatprep.subr.mxu0 0.0
  %1217 = vmatpush1.msra.mxu0 0.0
  %1218 = vmatprep.subr.mxu0 0.0
  %1219 = vmatpush1.msra.mxu0 0.0
  %1220 = vmatprep.subr.mxu0 0.0
  %1221 = vmatpush1.msra.mxu0 0.0
  %1222 = vmatprep.subr.mxu0 0.0
  %1223 = vmatpush1.msra.mxu0 0.0
  %1224 = vmatprep.subr.mxu0 0.0
  %1225 = vmatpush1.msra.mxu0 0.0
  %1226 = vmatprep.subr.mxu0 0.0
  %1227 = vmatpush1.msra.mxu0 0.0
  %1228 = vmatprep.subr.mxu0 0.0
  %1229 = vmatpush1.msra.mxu0 0.0
  %1230 = vmatprep.subr.mxu0 0.0
  %1231 = vmatpush1.msra.mxu0 0.0
  %1232 = vmatprep.subr.mxu0 0.0
  %1233 = vmatpush1.msra.mxu0 0.0
  %1234 = vmatprep.subr.mxu0 0.0
  %1235 = vmatpush1.msra.mxu0 0.0
  %1236 = vmatprep.mubr.f32.mxu0 0.0
  %1237 = vmatmul.mubr.f32.gmra.mrb[0].mxu0 %v1161
  %v1238 = vpop.f32.mrb[0].mxu0
  %v1239 = vadd.f32 0.0, %v1238
  %v1240 = vpop.f32.mrb[0].mxu0
  %1241 = vmatprep.mubr.f32.mxu0 0.0
  %1242 = vmatmul.mubr.f32.gmra.mrb[0].mxu0 %v1164
  %v1243 = vpop.f32.mrb[0].mxu0
  %v1244 = vadd.f32 0.0, %v1243
  %v1245 = vpop.f32.mrb[0].mxu0
  %1246 = vmatprep.mubr.f32.mxu0 0.0
  %1247 = vmatmul.mubr.f32.gmra.mrb[0].mxu0 %v1167
  %v1248 = vpop.f32.mrb[0].mxu0
  %v1249 = vadd.f32 0.0, %v1248
  %v1250 = vpop.f32.mrb[0].mxu0
  %1251 = vmatprep.mubr.f32.mxu0 0.0
  %1252 = vmatmul.mubr.f32.gmra.mrb[0].mxu0 %v1170
  %v1253 = vpop.f32.mrb[0].mxu0
  %v1254 = vadd.f32 0.0, %v1253
  %v1255 = vpop.f32.mrb[0].mxu0
  %1256 = vdwg.mxu0
  %v1258 = vsel %vm593, %v957, 0
  %v1261 = vsel %vm593, %v962, 0
  %v1264 = vsel %vm593, %v967, 0
  %v1267 = vsel %vm593, %v972, 0
  %1269 = vmatprep.subr.mxu0 0.0
  %1270 = vmatpush1.msra.mxu0 %v1151
  %1271 = vmatprep.subr.mxu0 0.0
  %1272 = vmatpush1.msra.mxu0 %v1152
  %1273 = vmatprep.subr.mxu0 0.0
  %1274 = vmatpush1.msra.mxu0 %v1153
  %1275 = vmatprep.subr.mxu0 0.0
  %1276 = vmatpush1.msra.mxu0 %v1154
  %1277 = vmatprep.subr.mxu0 0.0
  %1278 = vmatpush1.msra.mxu0 0.0
  %1279 = vmatprep.subr.mxu0 0.0
  %1280 = vmatpush1.msra.mxu0 0.0
  %1281 = vmatprep.subr.mxu0 0.0
  %1282 = vmatpush1.msra.mxu0 0.0
  %1283 = vmatprep.subr.mxu0 0.0
  %1284 = vmatpush1.msra.mxu0 0.0
  %1285 = vmatprep.subr.mxu0 0.0
  %1286 = vmatpush1.msra.mxu0 0.0
  %1287 = vmatprep.subr.mxu0 0.0
  %1288 = vmatpush1.msra.mxu0 0.0
  %1289 = vmatprep.subr.mxu0 0.0
  %1290 = vmatpush1.msra.mxu0 0.0
  %1291 = vmatprep.subr.mxu0 0.0
  %1292 = vmatpush1.msra.mxu0 0.0
  %1293 = vmatprep.subr.mxu0 0.0
  %1294 = vmatpush1.msra.mxu0 0.0
  %1295 = vmatprep.subr.mxu0 0.0
  %1296 = vmatpush1.msra.mxu0 0.0
  %1297 = vmatprep.subr.mxu0 0.0
  %1298 = vmatpush1.msra.mxu0 0.0
  %1299 = vmatprep.subr.mxu0 0.0
  %1300 = vmatpush1.msra.mxu0 0.0
  %1301 = vmatprep.subr.mxu0 0.0
  %1302 = vmatpush1.msra.mxu0 0.0
  %1303 = vmatprep.subr.mxu0 0.0
  %1304 = vmatpush1.msra.mxu0 0.0
  %1305 = vmatprep.subr.mxu0 0.0
  %1306 = vmatpush1.msra.mxu0 0.0
  %1307 = vmatprep.subr.mxu0 0.0
  %1308 = vmatpush1.msra.mxu0 0.0
  %1309 = vmatprep.subr.mxu0 0.0
  %1310 = vmatpush1.msra.mxu0 0.0
  %1311 = vmatprep.subr.mxu0 0.0
  %1312 = vmatpush1.msra.mxu0 0.0
  %1313 = vmatprep.subr.mxu0 0.0
  %1314 = vmatpush1.msra.mxu0 0.0
  %1315 = vmatprep.subr.mxu0 0.0
  %1316 = vmatpush1.msra.mxu0 0.0
  %1317 = vmatprep.subr.mxu0 0.0
  %1318 = vmatpush1.msra.mxu0 0.0
  %1319 = vmatprep.subr.mxu0 0.0
  %1320 = vmatpush1.msra.mxu0 0.0
  %1321 = vmatprep.subr.mxu0 0.0
  %1322 = vmatpush1.msra.mxu0 0.0
  %1323 = vmatprep.subr.mxu0 0.0
  %1324 = vmatpush1.msra.mxu0 0.0
  %1325 = vmatprep.subr.mxu0 0.0
  %1326 = vmatpush1.msra.mxu0 0.0
  %1327 = vmatprep.subr.mxu0 0.0
  %1328 = vmatpush1.msra.mxu0 0.0
  %1329 = vmatprep.subr.mxu0 0.0
  %1330 = vmatpush1.msra.mxu0 0.0
  %1331 = vmatprep.subr.mxu0 0.0
  %1332 = vmatpush1.msra.mxu0 0.0
  %1333 = vmatprep.mubr.f32.mxu0 0.0
  %1334 = vmatmul.mubr.f32.gmra.mrb[0].mxu0 %v1258
  %v1335 = vpop.f32.mrb[0].mxu0
  %v1336 = vadd.f32 %v1239, %v1335
  %v1337 = vpop.f32.mrb[0].mxu0
  %1338 = vmatprep.mubr.f32.mxu0 0.0
  %1339 = vmatmul.mubr.f32.gmra.mrb[0].mxu0 %v1261
  %v1340 = vpop.f32.mrb[0].mxu0
  %v1341 = vadd.f32 %v1244, %v1340
  %v1342 = vpop.f32.mrb[0].mxu0
  %1343 = vmatprep.mubr.f32.mxu0 0.0
  %1344 = vmatmul.mubr.f32.gmra.mrb[0].mxu0 %v1264
  %v1345 = vpop.f32.mrb[0].mxu0
  %v1346 = vadd.f32 %v1249, %v1345
  %v1347 = vpop.f32.mrb[0].mxu0
  %1348 = vmatprep.mubr.f32.mxu0 0.0
  %1349 = vmatmul.mubr.f32.gmra.mrb[0].mxu0 %v1267
  %v1350 = vpop.f32.mrb[0].mxu0
  %v1351 = vadd.f32 %v1254, %v1350
  %v1352 = vpop.f32.mrb[0].mxu0
  %1353 = vdwg.mxu0
  %v1355 = vlaneseq
  %v1356 = vshrl.u32 %v1355, 7
  %v1357 = vsub.s32 0, %v1356
  %v1358 = vrot.slane %v1159, %v1357
  %v1360 = vadd.f32 %v1336, %v1358
  %v1361 = vadd.f32 %v1341, %v1358
  %v1362 = vadd.f32 %v1346, %v1358
  %v1363 = vadd.f32 %v1351, %v1358
  %1364 = vmatprep.subr.mxu0 0.0
  %1365 = vmatpush1.msra.mxu0 %v1155
  %1366 = vmatprep.subr.mxu0 0.0
  %1367 = vmatpush1.msra.mxu0 %v1156
  %1368 = vmatprep.subr.mxu0 0.0
  %1369 = vmatpush1.msra.mxu0 %v1157
  %1370 = vmatprep.subr.mxu0 0.0
  %1371 = vmatpush1.msra.mxu0 %v1158
  %1372 = vmatprep.subr.mxu0 0.0
  %1373 = vmatpush1.msra.mxu0 0.0
  %1374 = vmatprep.subr.mxu0 0.0
  %1375 = vmatpush1.msra.mxu0 0.0
  %1376 = vmatprep.subr.mxu0 0.0
  %1377 = vmatpush1.msra.mxu0 0.0
  %1378 = vmatprep.subr.mxu0 0.0
  %1379 = vmatpush1.msra.mxu0 0.0
  %1380 = vmatprep.subr.mxu0 0.0
  %1381 = vmatpush1.msra.mxu0 0.0
  %1382 = vmatprep.subr.mxu0 0.0
  %1383 = vmatpush1.msra.mxu0 0.0
  %1384 = vmatprep.subr.mxu0 0.0
  %1385 = vmatpush1.msra.mxu0 0.0
  %1386 = vmatprep.subr.mxu0 0.0
  %1387 = vmatpush1.msra.mxu0 0.0
  %1388 = vmatprep.subr.mxu0 0.0
  %1389 = vmatpush1.msra.mxu0 0.0
  %1390 = vmatprep.subr.mxu0 0.0
  %1391 = vmatpush1.msra.mxu0 0.0
  %1392 = vmatprep.subr.mxu0 0.0
  %1393 = vmatpush1.msra.mxu0 0.0
  %1394 = vmatprep.subr.mxu0 0.0
  %1395 = vmatpush1.msra.mxu0 0.0
  %1396 = vmatprep.subr.mxu0 0.0
  %1397 = vmatpush1.msra.mxu0 0.0
  %1398 = vmatprep.subr.mxu0 0.0
  %1399 = vmatpush1.msra.mxu0 0.0
  %1400 = vmatprep.subr.mxu0 0.0
  %1401 = vmatpush1.msra.mxu0 0.0
  %1402 = vmatprep.subr.mxu0 0.0
  %1403 = vmatpush1.msra.mxu0 0.0
  %1404 = vmatprep.subr.mxu0 0.0
  %1405 = vmatpush1.msra.mxu0 0.0
  %1406 = vmatprep.subr.mxu0 0.0
  %1407 = vmatpush1.msra.mxu0 0.0
  %1408 = vmatprep.subr.mxu0 0.0
  %1409 = vmatpush1.msra.mxu0 0.0
  %1410 = vmatprep.subr.mxu0 0.0
  %1411 = vmatpush1.msra.mxu0 0.0
  %1412 = vmatprep.subr.mxu0 0.0
  %1413 = vmatpush1.msra.mxu0 0.0
  %1414 = vmatprep.subr.mxu0 0.0
  %1415 = vmatpush1.msra.mxu0 0.0
  %1416 = vmatprep.subr.mxu0 0.0
  %1417 = vmatpush1.msra.mxu0 0.0
  %1418 = vmatprep.subr.mxu0 0.0
  %1419 = vmatpush1.msra.mxu0 0.0
  %1420 = vmatprep.subr.mxu0 0.0
  %1421 = vmatpush1.msra.mxu0 0.0
  %1422 = vmatprep.subr.mxu0 0.0
  %1423 = vmatpush1.msra.mxu0 0.0
  %1424 = vmatprep.subr.mxu0 0.0
  %1425 = vmatpush1.msra.mxu0 0.0
  %1426 = vmatprep.subr.mxu0 0.0
  %1427 = vmatpush1.msra.mxu0 0.0
  %1428 = vmatprep.mubr.f32.mxu0 0.0
  %1429 = vmatmul.mubr.f32.gmra.mrb[0].mxu0 %v1258
  %v1430 = vpop.f32.mrb[0].mxu0
  %v1431 = vadd.f32 0.0, %v1430
  %v1432 = vpop.f32.mrb[0].mxu0
  %1433 = vmatprep.mubr.f32.mxu0 0.0
  %1434 = vmatmul.mubr.f32.gmra.mrb[0].mxu0 %v1261
  %v1435 = vpop.f32.mrb[0].mxu0
  %v1436 = vadd.f32 0.0, %v1435
  %v1437 = vpop.f32.mrb[0].mxu0
  %1438 = vmatprep.mubr.f32.mxu0 0.0
  %1439 = vmatmul.mubr.f32.gmra.mrb[0].mxu0 %v1264
  %v1440 = vpop.f32.mrb[0].mxu0
  %v1441 = vadd.f32 0.0, %v1440
  %v1442 = vpop.f32.mrb[0].mxu0
  %1443 = vmatprep.mubr.f32.mxu0 0.0
  %1444 = vmatmul.mubr.f32.gmra.mrb[0].mxu0 %v1267
  %v1445 = vpop.f32.mrb[0].mxu0
  %v1446 = vadd.f32 0.0, %v1445
  %v1447 = vpop.f32.mrb[0].mxu0
  %1448 = vdwg.mxu0
  %1449 = vmatprep.subr.mxu0 0.0
  %1450 = vmatpush1.msra.mxu0 %v1151
  %1451 = vmatprep.subr.mxu0 0.0
  %1452 = vmatpush1.msra.mxu0 %v1152
  %1453 = vmatprep.subr.mxu0 0.0
  %1454 = vmatpush1.msra.mxu0 %v1153
  %1455 = vmatprep.subr.mxu0 0.0
  %1456 = vmatpush1.msra.mxu0 %v1154
  %1457 = vmatprep.subr.mxu0 0.0
  %1458 = vmatpush1.msra.mxu0 0.0
  %1459 = vmatprep.subr.mxu0 0.0
  %1460 = vmatpush1.msra.mxu0 0.0
  %1461 = vmatprep.subr.mxu0 0.0
  %1462 = vmatpush1.msra.mxu0 0.0
  %1463 = vmatprep.subr.mxu0 0.0
  %1464 = vmatpush1.msra.mxu0 0.0
  %1465 = vmatprep.subr.mxu0 0.0
  %1466 = vmatpush1.msra.mxu0 0.0
  %1467 = vmatprep.subr.mxu0 0.0
  %1468 = vmatpush1.msra.mxu0 0.0
  %1469 = vmatprep.subr.mxu0 0.0
  %1470 = vmatpush1.msra.mxu0 0.0
  %1471 = vmatprep.subr.mxu0 0.0
  %1472 = vmatpush1.msra.mxu0 0.0
  %1473 = vmatprep.subr.mxu0 0.0
  %1474 = vmatpush1.msra.mxu0 0.0
  %1475 = vmatprep.subr.mxu0 0.0
  %1476 = vmatpush1.msra.mxu0 0.0
  %1477 = vmatprep.subr.mxu0 0.0
  %1478 = vmatpush1.msra.mxu0 0.0
  %1479 = vmatprep.subr.mxu0 0.0
  %1480 = vmatpush1.msra.mxu0 0.0
  %1481 = vmatprep.subr.mxu0 0.0
  %1482 = vmatpush1.msra.mxu0 0.0
  %1483 = vmatprep.subr.mxu0 0.0
  %1484 = vmatpush1.msra.mxu0 0.0
  %1485 = vmatprep.subr.mxu0 0.0
  %1486 = vmatpush1.msra.mxu0 0.0
  %1487 = vmatprep.subr.mxu0 0.0
  %1488 = vmatpush1.msra.mxu0 0.0
  %1489 = vmatprep.subr.mxu0 0.0
  %1490 = vmatpush1.msra.mxu0 0.0
  %1491 = vmatprep.subr.mxu0 0.0
  %1492 = vmatpush1.msra.mxu0 0.0
  %1493 = vmatprep.subr.mxu0 0.0
  %1494 = vmatpush1.msra.mxu0 0.0
  %1495 = vmatprep.subr.mxu0 0.0
  %1496 = vmatpush1.msra.mxu0 0.0
  %1497 = vmatprep.subr.mxu0 0.0
  %1498 = vmatpush1.msra.mxu0 0.0
  %1499 = vmatprep.subr.mxu0 0.0
  %1500 = vmatpush1.msra.mxu0 0.0
  %1501 = vmatprep.subr.mxu0 0.0
  %1502 = vmatpush1.msra.mxu0 0.0
  %1503 = vmatprep.subr.mxu0 0.0
  %1504 = vmatpush1.msra.mxu0 0.0
  %1505 = vmatprep.subr.mxu0 0.0
  %1506 = vmatpush1.msra.mxu0 0.0
  %1507 = vmatprep.subr.mxu0 0.0
  %1508 = vmatpush1.msra.mxu0 0.0
  %1509 = vmatprep.subr.mxu0 0.0
  %1510 = vmatpush1.msra.mxu0 0.0
  %1511 = vmatprep.subr.mxu0 0.0
  %1512 = vmatpush1.msra.mxu0 0.0
  %1513 = vmatprep.mubr.f32.mxu0 0.0
  %1514 = vmatmul.mubr.f32.gmra.mrb[0].mxu0 %v1161
  %v1515 = vpop.f32.mrb[0].mxu0
  %v1516 = vadd.f32 %v1431, %v1515
  %v1517 = vpop.f32.mrb[0].mxu0
  %1518 = vmatprep.mubr.f32.mxu0 0.0
  %1519 = vmatmul.mubr.f32.gmra.mrb[0].mxu0 %v1164
  %v1520 = vpop.f32.mrb[0].mxu0
  %v1521 = vadd.f32 %v1436, %v1520
  %v1522 = vpop.f32.mrb[0].mxu0
  %1523 = vmatprep.mubr.f32.mxu0 0.0
  %1524 = vmatmul.mubr.f32.gmra.mrb[0].mxu0 %v1167
  %v1525 = vpop.f32.mrb[0].mxu0
  %v1526 = vadd.f32 %v1441, %v1525
  %v1527 = vpop.f32.mrb[0].mxu0
  %1528 = vmatprep.mubr.f32.mxu0 0.0
  %1529 = vmatmul.mubr.f32.gmra.mrb[0].mxu0 %v1170
  %v1530 = vpop.f32.mrb[0].mxu0
  %v1531 = vadd.f32 %v1446, %v1530
  %v1532 = vpop.f32.mrb[0].mxu0
  %1533 = vdwg.mxu0
  %v1534 = vadd.f32 %v1516, %v1358
  %v1535 = vadd.f32 %v1521, %v1358
  %v1536 = vadd.f32 %v1526, %v1358
  %v1537 = vadd.f32 %v1531, %v1358
  %1538 = vst.msk [vmem:[%s14] sm:$0xff] %vm198, %v1360
  %1539 = vst.msk [vmem:[%s14 + $0x8] sm:$0xff] %vm198, %v1361
  %1540 = vst.msk [vmem:[%s14 + $0x10] sm:$0xff] %vm198, %v1362
  %1541 = vst.msk [vmem:[%s14 + $0x18] sm:$0xff] %vm198, %v1363
  %1542 = vst.msk [vmem:[%s14 + $0x20] sm:$0xff] %vm198, %v1534
  %1543 = vst.msk [vmem:[%s14 + $0x28] sm:$0xff] %vm198, %v1535
  %1544 = vst.msk [vmem:[%s14 + $0x30] sm:$0xff] %vm198, %v1536
  %1545 = vst.msk [vmem:[%s14 + $0x38] sm:$0xff] %vm198, %v1537
  // Predicated region
  $region58: #{sage_forward.1} parent=0 // pred_check
    _
  $region59: #{sage_forward.1} parent=0 // pred_check_branch
    %1547 = sbr.rel (0) target = $region61
  $region60: #{sage_forward.1} parent=0 // pred_region
    _
  $region61: #{sage_forward.1} parent=0 // pred_fallthru
    _
  // Predicated region
  $region62: #{sage_forward.1} parent=0 // pred_check
    _
  $region63: #{sage_forward.1} parent=0 // pred_check_branch
    %1549 = sbr.rel (0) target = $region65
  $region64: #{sage_forward.1} parent=0 // pred_region
    _
  $region65: #{sage_forward.1} parent=0 // pred_fallthru
    _

</llo_original>
